<compile_context>
chip_gen: v6e
topology: v6e:2x2x1
jax: 0.10.0
libtpu: 0.0.40
codegen_flags: <defaults>
</compile_context>

<pallas_src>
import jax
import jax.numpy as jnp
from jax import lax
from jax.experimental import pallas as pl
from jax.experimental.pallas import tpu as pltpu

EMBED = 32          # embedding_size
STEPS = 5           # Set2Set processing_steps
NUM_CLASSES = 10
_LANE = 128         # lane-aligned starts for the packed parameter slabs


def _net_kernel(x_ref, xt_ref, batch_ref, wslab_ref, bslab_ref, out_ref):
    D = EMBED
    x = x_ref[...]                 # [N, D] bf16  (readout RHS)
    xt = xt_ref[...]               # [D, N] bf16  (score RHS, transpose hoisted to glue)
    node_graph = batch_ref[...]    # [1, N] int32 graph id per node
    B = out_ref.shape[0]
    N = x.shape[0]

    # ---- packed bf16 weight slab (lane-aligned static slices) ----
    w_hr = wslab_ref[:, 0:4 * D]                                   # [2D, 4D] fused gate weight
    l0w = wslab_ref[:, _LANE:_LANE + D]                            # [2D, D]  lin0 weight (pre-T)
    l1w = wslab_ref[0:D, 2 * _LANE:2 * _LANE + NUM_CLASSES]        # [D, 10]  lin1 weight (pre-T)

    # ---- packed f32 bias slab ----
    b_g = bslab_ref[:, 0:4 * D]                                    # [1, 4D] fused LSTM bias
    l0b = bslab_ref[:, _LANE:_LANE + D]                            # [1, D]
    l1b = bslab_ref[:, 2 * _LANE:2 * _LANE + NUM_CLASSES]          # [1, 10]

    # ---- attention mask built in-kernel: member[b, n] = (batch[n] == b) ----
    graph_ids = lax.broadcasted_iota(jnp.int32, (B, N), 0)         # [B, N]
    member = node_graph == graph_ids                               # [B, N] bool
    # Note: an empty graph (no nodes) would make its softmax uniform over all
    # nodes (cross-graph leakage) instead of the reference's 0/0 — documented.

    h0 = jnp.zeros((B, D), jnp.float32)
    c0 = jnp.zeros((B, D), jnp.float32)
    r0 = jnp.zeros((B, D), jnp.float32)

    def step(_, carry):
        h, c, r = carry
        # ---- single-layer LSTM, PyTorch gate order (i, f, g, o) ----
        # LSTM input is q_star = [q_prev, r_prev]; for a 1-layer nn.LSTM the
        # output q equals the hidden state h, so the q-half of W_ih was folded
        # into W_hh in glue and the two matmuls are fused into one K=2D matmul.
        hr = jnp.concatenate(
            [h.astype(jnp.bfloat16), r.astype(jnp.bfloat16)], axis=-1)       # [B, 2D]
        gates = jnp.dot(hr, w_hr, preferred_element_type=jnp.float32) + b_g  # [B, 4D] f32
        i_g = jax.nn.sigmoid(gates[:, 0 * D:1 * D])
        f_g = jax.nn.sigmoid(gates[:, 1 * D:2 * D])
        g_g = jnp.tanh(gates[:, 2 * D:3 * D])
        o_g = jax.nn.sigmoid(gates[:, 3 * D:4 * D])
        c_new = f_g * c + i_g * g_g
        h_new = o_g * jnp.tanh(c_new)                                        # == q

        # ---- attention as a lane-dense [B, N] score matrix (no per-step transpose) ----
        s = jnp.dot(h_new.astype(jnp.bfloat16), xt,
                    preferred_element_type=jnp.float32)                      # [B, N] f32
        s = jnp.where(member, s, -1e30)
        s = s - jnp.max(s, axis=-1, keepdims=True)
        p = jnp.exp(s)                                                       # masked -> 0, f32
        denom = jnp.sum(p, axis=-1, keepdims=True)                           # [B, 1] f32

        # ---- readout with deferred softmax normalization (exact) ----
        r_un = jnp.dot(p.astype(jnp.bfloat16), x,
                       preferred_element_type=jnp.float32)                   # [B, D]
        r_new = r_un * pl.reciprocal(denom, approx=True)                     # broadcast over D
        return (h_new, c_new, r_new)

    h, c, r = lax.fori_loop(0, STEPS, step, (h0, c0, r0), unroll=True)

    # ---- lin0(q_star) + tanh, q_star = [q, r], bf16 MXU operands ----
    hr = jnp.concatenate([h.astype(jnp.bfloat16), r.astype(jnp.bfloat16)], axis=-1)
    hid = jnp.tanh(jnp.dot(hr, l0w, preferred_element_type=jnp.float32) + l0b)   # [B, D] f32

    # ---- lin1 + softmax(-1); exact f32 divide for the user-visible output ----
    logits = jnp.dot(hid.astype(jnp.bfloat16), l1w,
                     preferred_element_type=jnp.float32) + l1b               # [B, 10]
    logits = logits - jnp.max(logits, axis=-1, keepdims=True)
    pe = jnp.exp(logits)
    out_ref[...] = pe / jnp.sum(pe, axis=-1, keepdims=True)


def _prepare_params(params):
    """Pre-transpose / fuse / pack the PyTorch-layout weights into two slabs (runs once, outside the kernel)."""
    D = EMBED
    w_ih, w_hh = params["w_ih"], params["w_hh"]          # [4D, 2D], [4D, D]
    # q_prev == h_prev for a single-layer LSTM -> fold W_ih[:, :D] into W_hh,
    # then fuse the h-half and r-half into one [2D, 4D] gate weight.
    w_h = (w_ih[:, :D] + w_hh).T                          # [D, 4D]
    w_r = w_ih[:, D:].T                                   # [D, 4D]
    w_hr = jnp.concatenate([w_h, w_r], axis=0)            # [2D, 4D]
    l0w = params["lin0_w"].T                              # [2D, D]
    l1w = params["lin1_w"].T                              # [D, 10]

    width = 2 * _LANE + NUM_CLASSES                       # lane-aligned starts: 0, 128, 256
    wslab = jnp.zeros((2 * D, width), jnp.float32)
    wslab = wslab.at[:, 0:4 * D].set(w_hr)
    wslab = wslab.at[:, _LANE:_LANE + D].set(l0w)
    wslab = wslab.at[0:D, 2 * _LANE:2 * _LANE + NUM_CLASSES].set(l1w)
    wslab = wslab.astype(jnp.bfloat16)                    # [2D, width] bf16

    bslab = jnp.zeros((1, width), jnp.float32)
    bslab = bslab.at[:, 0:4 * D].set(params["b_ih"] + params["b_hh"])
    bslab = bslab.at[:, _LANE:_LANE + D].set(params["lin0_b"])
    bslab = bslab.at[:, 2 * _LANE:2 * _LANE + NUM_CLASSES].set(params["lin1_b"])
    return wslab, bslab


def net_forward(x, batch, params, num_graphs):
    """x: [N, D] float32, batch: [N] int32 graph ids. Returns flat [num_graphs*10]."""
    wslab, bslab = _prepare_params(params)

    x_bf = x.astype(jnp.bfloat16)                         # [N, D]
    xt_bf = x_bf.T                                        # [D, N], transposed once in glue
    batch2d = batch.astype(jnp.int32)[None, :]            # [1, N]

    N, D = x.shape
    B = int(num_graphs)

    # VMEM budget: inputs + output + in-kernel [B, N] intermediates (+ margin),
    # floored at the 16 MiB v5e scoped default and capped for v7x's 64 MiB.
    vmem_bytes = (2 * N * D * 2            # x, x^T (bf16)
                  + N * 4                  # batch ids
                  + wslab.size * 2 + bslab.size * 4
                  + B * NUM_CLASSES * 4    # output
                  + 6 * B * N * 4          # member / s / p intermediates
                  + (2 << 20))
    vmem_bytes = int(min(max(vmem_bytes, 16 << 20), 64 << 20))

    vmem = pl.BlockSpec(memory_space=pltpu.MemorySpace.VMEM)
    out = pl.pallas_call(
        _net_kernel,
        out_shape=jax.ShapeDtypeStruct((B, NUM_CLASSES), jnp.float32),
        in_specs=[vmem] * 5,
        out_specs=vmem,
        compiler_params=pltpu.CompilerParams(vmem_limit_bytes=vmem_bytes),
    )(x_bf, xt_bf, batch2d, wslab, bslab)
    return out.reshape(-1)   # == out.view(-1)


def init_params(key, D):
    ks = jax.random.split(key, 8)
    scale = 0.1
    return {
        # LSTM(input=2D, hidden=D): PyTorch weight_ih [4D, 2D], weight_hh [4D, D]
        "w_ih":  scale * jax.random.normal(ks[0], (4 * D, 2 * D), jnp.float32),
        "w_hh":  scale * jax.random.normal(ks[1], (4 * D, D), jnp.float32),
        "b_ih":  scale * jax.random.normal(ks[2], (1, 4 * D), jnp.float32),
        "b_hh":  scale * jax.random.normal(ks[3], (1, 4 * D), jnp.float32),
        # lin0: 2D -> D
        "lin0_w": scale * jax.random.normal(ks[4], (D, 2 * D), jnp.float32),
        "lin0_b": scale * jax.random.normal(ks[5], (1, D), jnp.float32),
        # lin1: D -> 10
        "lin1_w": scale * jax.random.normal(ks[6], (NUM_CLASSES, D), jnp.float32),
        "lin1_b": scale * jax.random.normal(ks[7], (1, NUM_CLASSES), jnp.float32),
    }


def _ref_forward(x, batch, params, num_graphs):
    """Pure-JAX f32 reference following the original PyTorch algorithm exactly."""
    D = x.shape[1]
    w_ih, w_hh = params["w_ih"], params["w_hh"]
    b_ih, b_hh = params["b_ih"][0], params["b_hh"][0]
    h = jnp.zeros((num_graphs, D), jnp.float32)
    c = jnp.zeros((num_graphs, D), jnp.float32)
    q_star = jnp.zeros((num_graphs, 2 * D), jnp.float32)
    for _ in range(STEPS):
        gates = q_star @ w_ih.T + b_ih + h @ w_hh.T + b_hh
        i = jax.nn.sigmoid(gates[:, :D])
        f = jax.nn.sigmoid(gates[:, D:2 * D])
        g = jnp.tanh(gates[:, 2 * D:3 * D])
        o = jax.nn.sigmoid(gates[:, 3 * D:])
        c = f * c + i * g
        h = o * jnp.tanh(c)
        q = h
        e = jnp.sum(x * q[batch], axis=-1)                               # [N]
        seg_max = jax.ops.segment_max(e, batch, num_segments=num_graphs)
        a_un = jnp.exp(e - seg_max[batch])
        denom = jax.ops.segment_sum(a_un, batch, num_segments=num_graphs)
        a = a_un / denom[batch]
        r = jax.ops.segment_sum(a[:, None] * x, batch, num_segments=num_graphs)
        q_star = jnp.concatenate([q, r], axis=-1)
    hid = jnp.tanh(q_star @ params["lin0_w"].T + params["lin0_b"][0])
    logits = hid @ params["lin1_w"].T + params["lin1_b"][0]
    return jax.nn.softmax(logits, axis=-1).reshape(-1)


if __name__ == "__main__":
    key = jax.random.PRNGKey(0)
    k_x, k_p = jax.random.split(key)

    N = 8            # total nodes
    B = 2            # graphs in the batch
    D = EMBED

    x = jax.random.normal(k_x, (N, D), jnp.float32)
    batch = jnp.array([0, 0, 0, 0, 1, 1, 1, 1], dtype=jnp.int32)
    params = init_params(k_p, D)

    out = net_forward(x, batch, params, num_graphs=B)
    jax.block_until_ready(out)

    assert out.shape == (B * NUM_CLASSES,)
    # each graph's 10-way softmax sums to 1 (final divide is exact f32)
    sums = out.reshape(B, NUM_CLASSES).sum(axis=-1)
    assert jnp.allclose(sums, 1.0, atol=1e-4), sums

    # tolerance check vs. pure-f32 reference (kernel uses bf16 MXU operands
    # and an approximate reciprocal inside the loop)
    ref = _ref_forward(x, batch, params, num_graphs=B)
    assert jnp.max(jnp.abs(out - ref)) < 5e-2, jnp.max(jnp.abs(out - ref))

    print("KERNEL_OK")
</pallas_src>

<mosaic_0001>
module attributes {stable_mosaic.version = 11 : i64} {
  func.func @_net_kernel(%arg0: memref<8x32xbf16, #tpu.memory_space<vmem>>, %arg1: memref<32x8xbf16, #tpu.memory_space<vmem>>, %arg2: memref<1x8xi32, #tpu.memory_space<vmem>>, %arg3: memref<64x266xbf16, #tpu.memory_space<vmem>>, %arg4: memref<1x266xf32, #tpu.memory_space<vmem>>, %arg5: memref<2x10xf32, #tpu.memory_space<vmem>>) attributes {dimension_semantics = [], scalar_prefetch = 0 : i64, scratch_operands = 0 : i64, tpu.core_type = #tpu.core_type<tc>} {
    %c0 = arith.constant 0 : index
    %c0_0 = arith.constant 0 : index
    %0 = vector.load %arg0[%c0, %c0_0] : memref<8x32xbf16, #tpu.memory_space<vmem>>, vector<8x32xbf16>
    %c0_1 = arith.constant 0 : index
    %c0_2 = arith.constant 0 : index
    %1 = vector.load %arg1[%c0_1, %c0_2] : memref<32x8xbf16, #tpu.memory_space<vmem>>, vector<32x8xbf16>
    %c0_3 = arith.constant 0 : index
    %c0_4 = arith.constant 0 : index
    %2 = vector.load %arg2[%c0_3, %c0_4] : memref<1x8xi32, #tpu.memory_space<vmem>>, vector<1x8xi32>
    %c0_5 = arith.constant 0 : index
    %c0_6 = arith.constant 0 : index
    %3 = vector.load %arg3[%c0_5, %c0_6] : memref<64x266xbf16, #tpu.memory_space<vmem>>, vector<64x128xbf16>
    %c0_7 = arith.constant 0 : index
    %c128 = arith.constant 128 : index
    %4 = vector.load %arg3[%c0_7, %c128] : memref<64x266xbf16, #tpu.memory_space<vmem>>, vector<64x32xbf16>
    %c0_8 = arith.constant 0 : index
    %c256 = arith.constant 256 : index
    %5 = vector.load %arg3[%c0_8, %c256] : memref<64x266xbf16, #tpu.memory_space<vmem>>, vector<32x10xbf16>
    %c0_9 = arith.constant 0 : index
    %c0_10 = arith.constant 0 : index
    %6 = vector.load %arg4[%c0_9, %c0_10] : memref<1x266xf32, #tpu.memory_space<vmem>>, vector<1x128xf32>
    %c0_11 = arith.constant 0 : index
    %c128_12 = arith.constant 128 : index
    %7 = vector.load %arg4[%c0_11, %c128_12] : memref<1x266xf32, #tpu.memory_space<vmem>>, vector<1x32xf32>
    %c0_13 = arith.constant 0 : index
    %c256_14 = arith.constant 256 : index
    %8 = vector.load %arg4[%c0_13, %c256_14] : memref<1x266xf32, #tpu.memory_space<vmem>>, vector<1x10xf32>
    %9 = tpu.iota {dimensions = array<i32: 0>} : vector<2x8xi32>
    %10 = vector.broadcast %2 : vector<1x8xi32> to vector<2x8xi32>
    %11 = arith.cmpi eq, %10, %9 : vector<2x8xi32>
    %cst = arith.constant 0.000000e+00 : f32
    %12 = vector.broadcast %cst : f32 to vector<2x32xf32>
    %cst_15 = arith.constant 0.000000e+00 : f32
    %13 = vector.broadcast %cst_15 : f32 to vector<2x32xf32>
    %cst_16 = arith.constant 0.000000e+00 : f32
    %14 = vector.broadcast %cst_16 : f32 to vector<2x32xf32>
    %c0_i32 = arith.constant 0 : i32
    %15 = arith.truncf %12 : vector<2x32xf32> to vector<2x32xbf16>
    %16 = arith.truncf %14 : vector<2x32xf32> to vector<2x32xbf16>
    %17 = tpu.concatenate %15, %16 in 1 : vector<2x32xbf16>, vector<2x32xbf16> -> vector<2x64xbf16>
    %cst_17 = arith.constant dense<0.000000e+00> : vector<2x128xf32>
    %18 = tpu.matmul %17, %3, %cst_17 {dimension_numbers = #tpu.dot_dimension_numbers<[1], [0], [0], [1], [0, 0, 1, 1], [], []>} : vector<2x64xbf16>, vector<64x128xbf16>, vector<2x128xf32> -> vector<2x128xf32>
    %19 = vector.broadcast %6 : vector<1x128xf32> to vector<2x128xf32>
    %20 = arith.addf %18, %19 : vector<2x128xf32>
    %21 = vector.extract_strided_slice %20 {offsets = [0, 0], sizes = [2, 32], strides = [1, 1]} : vector<2x128xf32> to vector<2x32xf32>
    %22 = arith.negf %21 : vector<2x32xf32>
    %23 = math.exp %22 : vector<2x32xf32>
    %cst_18 = arith.constant 1.000000e+00 : f32
    %24 = vector.broadcast %cst_18 : f32 to vector<2x32xf32>
    %25 = arith.addf %24, %23 : vector<2x32xf32>
    %26 = arith.divf %24, %25 : vector<2x32xf32>
    %27 = vector.extract_strided_slice %20 {offsets = [0, 32], sizes = [2, 32], strides = [1, 1]} : vector<2x128xf32> to vector<2x32xf32>
    %28 = arith.negf %27 : vector<2x32xf32>
    %29 = math.exp %28 : vector<2x32xf32>
    %cst_19 = arith.constant 1.000000e+00 : f32
    %30 = vector.broadcast %cst_19 : f32 to vector<2x32xf32>
    %31 = arith.addf %30, %29 : vector<2x32xf32>
    %32 = arith.divf %30, %31 : vector<2x32xf32>
    %33 = vector.extract_strided_slice %20 {offsets = [0, 64], sizes = [2, 32], strides = [1, 1]} : vector<2x128xf32> to vector<2x32xf32>
    %34 = math.tanh %33 : vector<2x32xf32>
    %35 = vector.extract_strided_slice %20 {offsets = [0, 96], sizes = [2, 32], strides = [1, 1]} : vector<2x128xf32> to vector<2x32xf32>
    %36 = arith.negf %35 : vector<2x32xf32>
    %37 = math.exp %36 : vector<2x32xf32>
    %cst_20 = arith.constant 1.000000e+00 : f32
    %38 = vector.broadcast %cst_20 : f32 to vector<2x32xf32>
    %39 = arith.addf %38, %37 : vector<2x32xf32>
    %40 = arith.divf %38, %39 : vector<2x32xf32>
    %41 = arith.mulf %32, %13 : vector<2x32xf32>
    %42 = arith.mulf %26, %34 : vector<2x32xf32>
    %43 = arith.addf %41, %42 : vector<2x32xf32>
    %44 = math.tanh %43 : vector<2x32xf32>
    %45 = arith.mulf %40, %44 : vector<2x32xf32>
    %46 = arith.truncf %45 : vector<2x32xf32> to vector<2x32xbf16>
    %cst_21 = arith.constant dense<0.000000e+00> : vector<2x8xf32>
    %47 = tpu.matmul %46, %1, %cst_21 {dimension_numbers = #tpu.dot_dimension_numbers<[1], [0], [0], [1], [0, 0, 1, 1], [], []>} : vector<2x32xbf16>, vector<32x8xbf16>, vector<2x8xf32> -> vector<2x8xf32>
    %cst_22 = arith.constant -1.000000e+30 : f32
    %48 = vector.broadcast %cst_22 : f32 to vector<2x8xf32>
    %49 = arith.select %11, %47, %48 : vector<2x8xi1>, vector<2x8xf32>
    %cst_23 = arith.constant dense<0xFF800000> : vector<2xf32>
    %50 = vector.multi_reduction <maximumf>, %49, %cst_23 [1] : vector<2x8xf32> to vector<2xf32>
    %51 = vector.shape_cast %50 : vector<2xf32> to vector<2x1xf32>
    %52 = vector.broadcast %51 : vector<2x1xf32> to vector<2x8xf32>
    %53 = arith.subf %49, %52 : vector<2x8xf32>
    %54 = math.exp %53 : vector<2x8xf32>
    %cst_24 = arith.constant dense<0.000000e+00> : vector<2xf32>
    %55 = vector.multi_reduction <add>, %54, %cst_24 [1] : vector<2x8xf32> to vector<2xf32>
    %56 = vector.shape_cast %55 : vector<2xf32> to vector<2x1xf32>
    %57 = arith.truncf %54 : vector<2x8xf32> to vector<2x8xbf16>
    %cst_25 = arith.constant dense<0.000000e+00> : vector<2x32xf32>
    %58 = tpu.matmul %57, %0, %cst_25 {dimension_numbers = #tpu.dot_dimension_numbers<[1], [0], [0], [1], [0, 0, 1, 1], [], []>} : vector<2x8xbf16>, vector<8x32xbf16>, vector<2x32xf32> -> vector<2x32xf32>
    %59 = tpu.reciprocal %56 {approx = true} : vector<2x1xf32> -> vector<2x1xf32>
    %60 = vector.broadcast %59 : vector<2x1xf32> to vector<2x32xf32>
    %61 = arith.mulf %58, %60 : vector<2x32xf32>
    %c1_i32 = arith.constant 1 : i32
    %62 = arith.truncf %45 : vector<2x32xf32> to vector<2x32xbf16>
    %63 = arith.truncf %61 : vector<2x32xf32> to vector<2x32xbf16>
    %64 = tpu.concatenate %62, %63 in 1 : vector<2x32xbf16>, vector<2x32xbf16> -> vector<2x64xbf16>
    %cst_26 = arith.constant dense<0.000000e+00> : vector<2x128xf32>
    %65 = tpu.matmul %64, %3, %cst_26 {dimension_numbers = #tpu.dot_dimension_numbers<[1], [0], [0], [1], [0, 0, 1, 1], [], []>} : vector<2x64xbf16>, vector<64x128xbf16>, vector<2x128xf32> -> vector<2x128xf32>
    %66 = vector.broadcast %6 : vector<1x128xf32> to vector<2x128xf32>
    %67 = arith.addf %65, %66 : vector<2x128xf32>
    %68 = vector.extract_strided_slice %67 {offsets = [0, 0], sizes = [2, 32], strides = [1, 1]} : vector<2x128xf32> to vector<2x32xf32>
    %69 = arith.negf %68 : vector<2x32xf32>
    %70 = math.exp %69 : vector<2x32xf32>
    %cst_27 = arith.constant 1.000000e+00 : f32
    %71 = vector.broadcast %cst_27 : f32 to vector<2x32xf32>
    %72 = arith.addf %71, %70 : vector<2x32xf32>
    %73 = arith.divf %71, %72 : vector<2x32xf32>
    %74 = vector.extract_strided_slice %67 {offsets = [0, 32], sizes = [2, 32], strides = [1, 1]} : vector<2x128xf32> to vector<2x32xf32>
    %75 = arith.negf %74 : vector<2x32xf32>
    %76 = math.exp %75 : vector<2x32xf32>
    %cst_28 = arith.constant 1.000000e+00 : f32
    %77 = vector.broadcast %cst_28 : f32 to vector<2x32xf32>
    %78 = arith.addf %77, %76 : vector<2x32xf32>
    %79 = arith.divf %77, %78 : vector<2x32xf32>
    %80 = vector.extract_strided_slice %67 {offsets = [0, 64], sizes = [2, 32], strides = [1, 1]} : vector<2x128xf32> to vector<2x32xf32>
    %81 = math.tanh %80 : vector<2x32xf32>
    %82 = vector.extract_strided_slice %67 {offsets = [0, 96], sizes = [2, 32], strides = [1, 1]} : vector<2x128xf32> to vector<2x32xf32>
    %83 = arith.negf %82 : vector<2x32xf32>
    %84 = math.exp %83 : vector<2x32xf32>
    %cst_29 = arith.constant 1.000000e+00 : f32
    %85 = vector.broadcast %cst_29 : f32 to vector<2x32xf32>
    %86 = arith.addf %85, %84 : vector<2x32xf32>
    %87 = arith.divf %85, %86 : vector<2x32xf32>
    %88 = arith.mulf %79, %43 : vector<2x32xf32>
    %89 = arith.mulf %73, %81 : vector<2x32xf32>
    %90 = arith.addf %88, %89 : vector<2x32xf32>
    %91 = math.tanh %90 : vector<2x32xf32>
    %92 = arith.mulf %87, %91 : vector<2x32xf32>
    %93 = arith.truncf %92 : vector<2x32xf32> to vector<2x32xbf16>
    %cst_30 = arith.constant dense<0.000000e+00> : vector<2x8xf32>
    %94 = tpu.matmul %93, %1, %cst_30 {dimension_numbers = #tpu.dot_dimension_numbers<[1], [0], [0], [1], [0, 0, 1, 1], [], []>} : vector<2x32xbf16>, vector<32x8xbf16>, vector<2x8xf32> -> vector<2x8xf32>
    %cst_31 = arith.constant -1.000000e+30 : f32
    %95 = vector.broadcast %cst_31 : f32 to vector<2x8xf32>
    %96 = arith.select %11, %94, %95 : vector<2x8xi1>, vector<2x8xf32>
    %cst_32 = arith.constant dense<0xFF800000> : vector<2xf32>
    %97 = vector.multi_reduction <maximumf>, %96, %cst_32 [1] : vector<2x8xf32> to vector<2xf32>
    %98 = vector.shape_cast %97 : vector<2xf32> to vector<2x1xf32>
    %99 = vector.broadcast %98 : vector<2x1xf32> to vector<2x8xf32>
    %100 = arith.subf %96, %99 : vector<2x8xf32>
    %101 = math.exp %100 : vector<2x8xf32>
    %cst_33 = arith.constant dense<0.000000e+00> : vector<2xf32>
    %102 = vector.multi_reduction <add>, %101, %cst_33 [1] : vector<2x8xf32> to vector<2xf32>
    %103 = vector.shape_cast %102 : vector<2xf32> to vector<2x1xf32>
    %104 = arith.truncf %101 : vector<2x8xf32> to vector<2x8xbf16>
    %cst_34 = arith.constant dense<0.000000e+00> : vector<2x32xf32>
    %105 = tpu.matmul %104, %0, %cst_34 {dimension_numbers = #tpu.dot_dimension_numbers<[1], [0], [0], [1], [0, 0, 1, 1], [], []>} : vector<2x8xbf16>, vector<8x32xbf16>, vector<2x32xf32> -> vector<2x32xf32>
    %106 = tpu.reciprocal %103 {approx = true} : vector<2x1xf32> -> vector<2x1xf32>
    %107 = vector.broadcast %106 : vector<2x1xf32> to vector<2x32xf32>
    %108 = arith.mulf %105, %107 : vector<2x32xf32>
    %c2_i32 = arith.constant 2 : i32
    %109 = arith.truncf %92 : vector<2x32xf32> to vector<2x32xbf16>
    %110 = arith.truncf %108 : vector<2x32xf32> to vector<2x32xbf16>
    %111 = tpu.concatenate %109, %110 in 1 : vector<2x32xbf16>, vector<2x32xbf16> -> vector<2x64xbf16>
    %cst_35 = arith.constant dense<0.000000e+00> : vector<2x128xf32>
    %112 = tpu.matmul %111, %3, %cst_35 {dimension_numbers = #tpu.dot_dimension_numbers<[1], [0], [0], [1], [0, 0, 1, 1], [], []>} : vector<2x64xbf16>, vector<64x128xbf16>, vector<2x128xf32> -> vector<2x128xf32>
    %113 = vector.broadcast %6 : vector<1x128xf32> to vector<2x128xf32>
    %114 = arith.addf %112, %113 : vector<2x128xf32>
    %115 = vector.extract_strided_slice %114 {offsets = [0, 0], sizes = [2, 32], strides = [1, 1]} : vector<2x128xf32> to vector<2x32xf32>
    %116 = arith.negf %115 : vector<2x32xf32>
    %117 = math.exp %116 : vector<2x32xf32>
    %cst_36 = arith.constant 1.000000e+00 : f32
    %118 = vector.broadcast %cst_36 : f32 to vector<2x32xf32>
    %119 = arith.addf %118, %117 : vector<2x32xf32>
    %120 = arith.divf %118, %119 : vector<2x32xf32>
    %121 = vector.extract_strided_slice %114 {offsets = [0, 32], sizes = [2, 32], strides = [1, 1]} : vector<2x128xf32> to vector<2x32xf32>
    %122 = arith.negf %121 : vector<2x32xf32>
    %123 = math.exp %122 : vector<2x32xf32>
    %cst_37 = arith.constant 1.000000e+00 : f32
    %124 = vector.broadcast %cst_37 : f32 to vector<2x32xf32>
    %125 = arith.addf %124, %123 : vector<2x32xf32>
    %126 = arith.divf %124, %125 : vector<2x32xf32>
    %127 = vector.extract_strided_slice %114 {offsets = [0, 64], sizes = [2, 32], strides = [1, 1]} : vector<2x128xf32> to vector<2x32xf32>
    %128 = math.tanh %127 : vector<2x32xf32>
    %129 = vector.extract_strided_slice %114 {offsets = [0, 96], sizes = [2, 32], strides = [1, 1]} : vector<2x128xf32> to vector<2x32xf32>
    %130 = arith.negf %129 : vector<2x32xf32>
    %131 = math.exp %130 : vector<2x32xf32>
    %cst_38 = arith.constant 1.000000e+00 : f32
    %132 = vector.broadcast %cst_38 : f32 to vector<2x32xf32>
    %133 = arith.addf %132, %131 : vector<2x32xf32>
    %134 = arith.divf %132, %133 : vector<2x32xf32>
    %135 = arith.mulf %126, %90 : vector<2x32xf32>
    %136 = arith.mulf %120, %128 : vector<2x32xf32>
    %137 = arith.addf %135, %136 : vector<2x32xf32>
    %138 = math.tanh %137 : vector<2x32xf32>
    %139 = arith.mulf %134, %138 : vector<2x32xf32>
    %140 = arith.truncf %139 : vector<2x32xf32> to vector<2x32xbf16>
    %cst_39 = arith.constant dense<0.000000e+00> : vector<2x8xf32>
    %141 = tpu.matmul %140, %1, %cst_39 {dimension_numbers = #tpu.dot_dimension_numbers<[1], [0], [0], [1], [0, 0, 1, 1], [], []>} : vector<2x32xbf16>, vector<32x8xbf16>, vector<2x8xf32> -> vector<2x8xf32>
    %cst_40 = arith.constant -1.000000e+30 : f32
    %142 = vector.broadcast %cst_40 : f32 to vector<2x8xf32>
    %143 = arith.select %11, %141, %142 : vector<2x8xi1>, vector<2x8xf32>
    %cst_41 = arith.constant dense<0xFF800000> : vector<2xf32>
    %144 = vector.multi_reduction <maximumf>, %143, %cst_41 [1] : vector<2x8xf32> to vector<2xf32>
    %145 = vector.shape_cast %144 : vector<2xf32> to vector<2x1xf32>
    %146 = vector.broadcast %145 : vector<2x1xf32> to vector<2x8xf32>
    %147 = arith.subf %143, %146 : vector<2x8xf32>
    %148 = math.exp %147 : vector<2x8xf32>
    %cst_42 = arith.constant dense<0.000000e+00> : vector<2xf32>
    %149 = vector.multi_reduction <add>, %148, %cst_42 [1] : vector<2x8xf32> to vector<2xf32>
    %150 = vector.shape_cast %149 : vector<2xf32> to vector<2x1xf32>
    %151 = arith.truncf %148 : vector<2x8xf32> to vector<2x8xbf16>
    %cst_43 = arith.constant dense<0.000000e+00> : vector<2x32xf32>
    %152 = tpu.matmul %151, %0, %cst_43 {dimension_numbers = #tpu.dot_dimension_numbers<[1], [0], [0], [1], [0, 0, 1, 1], [], []>} : vector<2x8xbf16>, vector<8x32xbf16>, vector<2x32xf32> -> vector<2x32xf32>
    %153 = tpu.reciprocal %150 {approx = true} : vector<2x1xf32> -> vector<2x1xf32>
    %154 = vector.broadcast %153 : vector<2x1xf32> to vector<2x32xf32>
    %155 = arith.mulf %152, %154 : vector<2x32xf32>
    %c3_i32 = arith.constant 3 : i32
    %156 = arith.truncf %139 : vector<2x32xf32> to vector<2x32xbf16>
    %157 = arith.truncf %155 : vector<2x32xf32> to vector<2x32xbf16>
    %158 = tpu.concatenate %156, %157 in 1 : vector<2x32xbf16>, vector<2x32xbf16> -> vector<2x64xbf16>
    %cst_44 = arith.constant dense<0.000000e+00> : vector<2x128xf32>
    %159 = tpu.matmul %158, %3, %cst_44 {dimension_numbers = #tpu.dot_dimension_numbers<[1], [0], [0], [1], [0, 0, 1, 1], [], []>} : vector<2x64xbf16>, vector<64x128xbf16>, vector<2x128xf32> -> vector<2x128xf32>
    %160 = vector.broadcast %6 : vector<1x128xf32> to vector<2x128xf32>
    %161 = arith.addf %159, %160 : vector<2x128xf32>
    %162 = vector.extract_strided_slice %161 {offsets = [0, 0], sizes = [2, 32], strides = [1, 1]} : vector<2x128xf32> to vector<2x32xf32>
    %163 = arith.negf %162 : vector<2x32xf32>
    %164 = math.exp %163 : vector<2x32xf32>
    %cst_45 = arith.constant 1.000000e+00 : f32
    %165 = vector.broadcast %cst_45 : f32 to vector<2x32xf32>
    %166 = arith.addf %165, %164 : vector<2x32xf32>
    %167 = arith.divf %165, %166 : vector<2x32xf32>
    %168 = vector.extract_strided_slice %161 {offsets = [0, 32], sizes = [2, 32], strides = [1, 1]} : vector<2x128xf32> to vector<2x32xf32>
    %169 = arith.negf %168 : vector<2x32xf32>
    %170 = math.exp %169 : vector<2x32xf32>
    %cst_46 = arith.constant 1.000000e+00 : f32
    %171 = vector.broadcast %cst_46 : f32 to vector<2x32xf32>
    %172 = arith.addf %171, %170 : vector<2x32xf32>
    %173 = arith.divf %171, %172 : vector<2x32xf32>
    %174 = vector.extract_strided_slice %161 {offsets = [0, 64], sizes = [2, 32], strides = [1, 1]} : vector<2x128xf32> to vector<2x32xf32>
    %175 = math.tanh %174 : vector<2x32xf32>
    %176 = vector.extract_strided_slice %161 {offsets = [0, 96], sizes = [2, 32], strides = [1, 1]} : vector<2x128xf32> to vector<2x32xf32>
    %177 = arith.negf %176 : vector<2x32xf32>
    %178 = math.exp %177 : vector<2x32xf32>
    %cst_47 = arith.constant 1.000000e+00 : f32
    %179 = vector.broadcast %cst_47 : f32 to vector<2x32xf32>
    %180 = arith.addf %179, %178 : vector<2x32xf32>
    %181 = arith.divf %179, %180 : vector<2x32xf32>
    %182 = arith.mulf %173, %137 : vector<2x32xf32>
    %183 = arith.mulf %167, %175 : vector<2x32xf32>
    %184 = arith.addf %182, %183 : vector<2x32xf32>
    %185 = math.tanh %184 : vector<2x32xf32>
    %186 = arith.mulf %181, %185 : vector<2x32xf32>
    %187 = arith.truncf %186 : vector<2x32xf32> to vector<2x32xbf16>
    %cst_48 = arith.constant dense<0.000000e+00> : vector<2x8xf32>
    %188 = tpu.matmul %187, %1, %cst_48 {dimension_numbers = #tpu.dot_dimension_numbers<[1], [0], [0], [1], [0, 0, 1, 1], [], []>} : vector<2x32xbf16>, vector<32x8xbf16>, vector<2x8xf32> -> vector<2x8xf32>
    %cst_49 = arith.constant -1.000000e+30 : f32
    %189 = vector.broadcast %cst_49 : f32 to vector<2x8xf32>
    %190 = arith.select %11, %188, %189 : vector<2x8xi1>, vector<2x8xf32>
    %cst_50 = arith.constant dense<0xFF800000> : vector<2xf32>
    %191 = vector.multi_reduction <maximumf>, %190, %cst_50 [1] : vector<2x8xf32> to vector<2xf32>
    %192 = vector.shape_cast %191 : vector<2xf32> to vector<2x1xf32>
    %193 = vector.broadcast %192 : vector<2x1xf32> to vector<2x8xf32>
    %194 = arith.subf %190, %193 : vector<2x8xf32>
    %195 = math.exp %194 : vector<2x8xf32>
    %cst_51 = arith.constant dense<0.000000e+00> : vector<2xf32>
    %196 = vector.multi_reduction <add>, %195, %cst_51 [1] : vector<2x8xf32> to vector<2xf32>
    %197 = vector.shape_cast %196 : vector<2xf32> to vector<2x1xf32>
    %198 = arith.truncf %195 : vector<2x8xf32> to vector<2x8xbf16>
    %cst_52 = arith.constant dense<0.000000e+00> : vector<2x32xf32>
    %199 = tpu.matmul %198, %0, %cst_52 {dimension_numbers = #tpu.dot_dimension_numbers<[1], [0], [0], [1], [0, 0, 1, 1], [], []>} : vector<2x8xbf16>, vector<8x32xbf16>, vector<2x32xf32> -> vector<2x32xf32>
    %200 = tpu.reciprocal %197 {approx = true} : vector<2x1xf32> -> vector<2x1xf32>
    %201 = vector.broadcast %200 : vector<2x1xf32> to vector<2x32xf32>
    %202 = arith.mulf %199, %201 : vector<2x32xf32>
    %c4_i32 = arith.constant 4 : i32
    %203 = arith.truncf %186 : vector<2x32xf32> to vector<2x32xbf16>
    %204 = arith.truncf %202 : vector<2x32xf32> to vector<2x32xbf16>
    %205 = tpu.concatenate %203, %204 in 1 : vector<2x32xbf16>, vector<2x32xbf16> -> vector<2x64xbf16>
    %cst_53 = arith.constant dense<0.000000e+00> : vector<2x128xf32>
    %206 = tpu.matmul %205, %3, %cst_53 {dimension_numbers = #tpu.dot_dimension_numbers<[1], [0], [0], [1], [0, 0, 1, 1], [], []>} : vector<2x64xbf16>, vector<64x128xbf16>, vector<2x128xf32> -> vector<2x128xf32>
    %207 = vector.broadcast %6 : vector<1x128xf32> to vector<2x128xf32>
    %208 = arith.addf %206, %207 : vector<2x128xf32>
    %209 = vector.extract_strided_slice %208 {offsets = [0, 0], sizes = [2, 32], strides = [1, 1]} : vector<2x128xf32> to vector<2x32xf32>
    %210 = arith.negf %209 : vector<2x32xf32>
    %211 = math.exp %210 : vector<2x32xf32>
    %cst_54 = arith.constant 1.000000e+00 : f32
    %212 = vector.broadcast %cst_54 : f32 to vector<2x32xf32>
    %213 = arith.addf %212, %211 : vector<2x32xf32>
    %214 = arith.divf %212, %213 : vector<2x32xf32>
    %215 = vector.extract_strided_slice %208 {offsets = [0, 32], sizes = [2, 32], strides = [1, 1]} : vector<2x128xf32> to vector<2x32xf32>
    %216 = arith.negf %215 : vector<2x32xf32>
    %217 = math.exp %216 : vector<2x32xf32>
    %cst_55 = arith.constant 1.000000e+00 : f32
    %218 = vector.broadcast %cst_55 : f32 to vector<2x32xf32>
    %219 = arith.addf %218, %217 : vector<2x32xf32>
    %220 = arith.divf %218, %219 : vector<2x32xf32>
    %221 = vector.extract_strided_slice %208 {offsets = [0, 64], sizes = [2, 32], strides = [1, 1]} : vector<2x128xf32> to vector<2x32xf32>
    %222 = math.tanh %221 : vector<2x32xf32>
    %223 = vector.extract_strided_slice %208 {offsets = [0, 96], sizes = [2, 32], strides = [1, 1]} : vector<2x128xf32> to vector<2x32xf32>
    %224 = arith.negf %223 : vector<2x32xf32>
    %225 = math.exp %224 : vector<2x32xf32>
    %cst_56 = arith.constant 1.000000e+00 : f32
    %226 = vector.broadcast %cst_56 : f32 to vector<2x32xf32>
    %227 = arith.addf %226, %225 : vector<2x32xf32>
    %228 = arith.divf %226, %227 : vector<2x32xf32>
    %229 = arith.mulf %220, %184 : vector<2x32xf32>
    %230 = arith.mulf %214, %222 : vector<2x32xf32>
    %231 = arith.addf %229, %230 : vector<2x32xf32>
    %232 = math.tanh %231 : vector<2x32xf32>
    %233 = arith.mulf %228, %232 : vector<2x32xf32>
    %234 = arith.truncf %233 : vector<2x32xf32> to vector<2x32xbf16>
    %cst_57 = arith.constant dense<0.000000e+00> : vector<2x8xf32>
    %235 = tpu.matmul %234, %1, %cst_57 {dimension_numbers = #tpu.dot_dimension_numbers<[1], [0], [0], [1], [0, 0, 1, 1], [], []>} : vector<2x32xbf16>, vector<32x8xbf16>, vector<2x8xf32> -> vector<2x8xf32>
    %cst_58 = arith.constant -1.000000e+30 : f32
    %236 = vector.broadcast %cst_58 : f32 to vector<2x8xf32>
    %237 = arith.select %11, %235, %236 : vector<2x8xi1>, vector<2x8xf32>
    %cst_59 = arith.constant dense<0xFF800000> : vector<2xf32>
    %238 = vector.multi_reduction <maximumf>, %237, %cst_59 [1] : vector<2x8xf32> to vector<2xf32>
    %239 = vector.shape_cast %238 : vector<2xf32> to vector<2x1xf32>
    %240 = vector.broadcast %239 : vector<2x1xf32> to vector<2x8xf32>
    %241 = arith.subf %237, %240 : vector<2x8xf32>
    %242 = math.exp %241 : vector<2x8xf32>
    %cst_60 = arith.constant dense<0.000000e+00> : vector<2xf32>
    %243 = vector.multi_reduction <add>, %242, %cst_60 [1] : vector<2x8xf32> to vector<2xf32>
    %244 = vector.shape_cast %243 : vector<2xf32> to vector<2x1xf32>
    %245 = arith.truncf %242 : vector<2x8xf32> to vector<2x8xbf16>
    %cst_61 = arith.constant dense<0.000000e+00> : vector<2x32xf32>
    %246 = tpu.matmul %245, %0, %cst_61 {dimension_numbers = #tpu.dot_dimension_numbers<[1], [0], [0], [1], [0, 0, 1, 1], [], []>} : vector<2x8xbf16>, vector<8x32xbf16>, vector<2x32xf32> -> vector<2x32xf32>
    %247 = tpu.reciprocal %244 {approx = true} : vector<2x1xf32> -> vector<2x1xf32>
    %248 = vector.broadcast %247 : vector<2x1xf32> to vector<2x32xf32>
    %249 = arith.mulf %246, %248 : vector<2x32xf32>
    %250 = arith.truncf %233 : vector<2x32xf32> to vector<2x32xbf16>
    %251 = arith.truncf %249 : vector<2x32xf32> to vector<2x32xbf16>
    %252 = tpu.concatenate %250, %251 in 1 : vector<2x32xbf16>, vector<2x32xbf16> -> vector<2x64xbf16>
    %cst_62 = arith.constant dense<0.000000e+00> : vector<2x32xf32>
    %253 = tpu.matmul %252, %4, %cst_62 {dimension_numbers = #tpu.dot_dimension_numbers<[1], [0], [0], [1], [0, 0, 1, 1], [], []>} : vector<2x64xbf16>, vector<64x32xbf16>, vector<2x32xf32> -> vector<2x32xf32>
    %254 = vector.broadcast %7 : vector<1x32xf32> to vector<2x32xf32>
    %255 = arith.addf %253, %254 : vector<2x32xf32>
    %256 = math.tanh %255 : vector<2x32xf32>
    %257 = arith.truncf %256 : vector<2x32xf32> to vector<2x32xbf16>
    %cst_63 = arith.constant dense<0.000000e+00> : vector<2x10xf32>
    %258 = tpu.matmul %257, %5, %cst_63 {dimension_numbers = #tpu.dot_dimension_numbers<[1], [0], [0], [1], [0, 0, 1, 1], [], []>} : vector<2x32xbf16>, vector<32x10xbf16>, vector<2x10xf32> -> vector<2x10xf32>
    %259 = vector.broadcast %8 : vector<1x10xf32> to vector<2x10xf32>
    %260 = arith.addf %258, %259 : vector<2x10xf32>
    %cst_64 = arith.constant dense<0xFF800000> : vector<2xf32>
    %261 = vector.multi_reduction <maximumf>, %260, %cst_64 [1] : vector<2x10xf32> to vector<2xf32>
    %262 = vector.shape_cast %261 : vector<2xf32> to vector<2x1xf32>
    %263 = vector.broadcast %262 : vector<2x1xf32> to vector<2x10xf32>
    %264 = arith.subf %260, %263 : vector<2x10xf32>
    %265 = math.exp %264 : vector<2x10xf32>
    %cst_65 = arith.constant dense<0.000000e+00> : vector<2xf32>
    %266 = vector.multi_reduction <add>, %265, %cst_65 [1] : vector<2x10xf32> to vector<2xf32>
    %267 = vector.shape_cast %266 : vector<2xf32> to vector<2x1xf32>
    %268 = vector.broadcast %267 : vector<2x1xf32> to vector<2x10xf32>
    %269 = arith.divf %265, %268 : vector<2x10xf32>
    %c0_66 = arith.constant 0 : index
    %c0_67 = arith.constant 0 : index
    %270 = vector.load %arg5[%c0_66, %c0_67] : memref<2x10xf32, #tpu.memory_space<vmem>>, vector<2x10xf32>
    tpu.vector_store %arg5[%c0_66, %c0_67], %269 {strides = array<i32>} : memref<2x10xf32, #tpu.memory_space<vmem>>, vector<2x10xf32>,
    return
  }
}

</mosaic_0001>

<llo_original>
// kernel: tpu_custom_call.1
$region0: #{tpu_custom_call.1}
  #allocation0 [shape = 'u32[]', space=smem, size = 0x4, offset = 0x4, fixed_abs, tag = 'smem constant byte address 0x4 - core index']
  #allocation1 [shape = 'u32[144,128]{1,0:T(1,128)}', space=vmem, size = 0x12000, scoped, tag = 'internal scratch']
  %s0 = inlined_call_operand.vmem [shape: bf16[8,32], index: 0, kind: input, shape index: {}]
  %s1 = inlined_call_operand.vmem [shape: bf16[32,8], index: 1, kind: input, shape index: {}]
  %s2 = inlined_call_operand.vmem [shape: s32[1,8], index: 2, kind: input, shape index: {}]
  %s3 = inlined_call_operand.hbm [shape: bf16[64,266], index: 3, kind: input, shape index: {}]
  %s4 = inlined_call_operand.vmem [shape: f32[1,266], index: 4, kind: input, shape index: {}]
  %s5 = inlined_call_operand.hbm [shape: f32[2,10], index: 5, kind: output, shape index: {}]
  %s6 = sld [smem:[#allocation0]]
  $region34: #{tpu_custom_call.1} parent=0
    _
  %s8 = ssub.s32 1, %s6
  %s9 = scalar_select 0, %s8, %s6
  $region1: #{tpu_custom_call.1} parent=0
    #allocation2 [shape = 'u8[49152]{0}', space=vmem, size = 0xc000, scoped, tag = 'input window, operand 3, single buffered']
    #allocation3 [shape = 's32[1]{0}', space=sflag, size = 0x4, scoped, tag = 'scoped memory for tpu_custom_call.1']
    #allocation4 [shape = 's32[1]{0}', space=sflag, size = 0x4, scoped, tag = 'scoped memory for tpu_custom_call.1']
    #allocation5 [shape = 'u8[1024]{0}', space=vmem, size = 0x400, scoped, tag = 'output window, operand 0, single buffered']
    %10 = vsyncpa [#allocation3], 0
    %11 = vsyncpa [#allocation4], 0
    // Predicated region
    $region2: #{tpu_custom_call.1} parent=1 // pred_check
      _
    $region3: #{tpu_custom_call.1} parent=1 // pred_check_branch
      %13 = sbr.rel (0) target = $region5
    $region4: #{tpu_custom_call.1} parent=1 // pred_region
      _
    $region5: #{tpu_custom_call.1} parent=1 // pred_fallthru
      _
    // Predicated region
    $region6: #{tpu_custom_call.1} parent=1 // pred_check
      _
    $region7: #{tpu_custom_call.1} parent=1 // pred_check_branch
      %15 = sbr.rel (0) target = $region9
    $region8: #{tpu_custom_call.1} parent=1 // pred_region
      _
    $region9: #{tpu_custom_call.1} parent=1 // pred_fallthru
      _
    // Predicated region
    $region10: #{tpu_custom_call.1} parent=1 // pred_check
      _
    $region11: #{tpu_custom_call.1} parent=1 // pred_check_branch
      %17 = sbr.rel (0) target = $region13
    $region12: #{tpu_custom_call.1} parent=1 // pred_region
      _
    $region13: #{tpu_custom_call.1} parent=1 // pred_fallthru
      _
    // Predicated region
    $region14: #{tpu_custom_call.1} parent=1 // pred_check
      _
    $region15: #{tpu_custom_call.1} parent=1 // pred_check_branch
      %19 = sbr.rel (0) target = $region17
    $region16: #{tpu_custom_call.1} parent=1 // pred_region
      %s21 = ssub.s32 1536, 1536
      %22 = vsyncadd [#allocation3], %s21
      %s23 = sshll.u32 [#allocation2], 4
      %s24 = int_to_ptr.vmem [resolvable:$true] %s23
      %29 = dma.hbm_to_vmem [thread:$0]  %s3, 1536, %s24, [#allocation3], 192, 192, 12
    $region17: #{tpu_custom_call.1} parent=1 // pred_fallthru
      _
    // Predicated region
    $region18: #{tpu_custom_call.1} parent=1 // pred_check
      _
    $region19: #{tpu_custom_call.1} parent=1 // pred_check_branch
      %31 = sbr.rel (0) target = $region21
    $region20: #{tpu_custom_call.1} parent=1 // pred_region
      _
    $region21: #{tpu_custom_call.1} parent=1 // pred_fallthru
      _
    // Predicated region
    $region22: #{tpu_custom_call.1} parent=1 // pred_check
      _
    $region23: #{tpu_custom_call.1} parent=1 // pred_check_branch
      %33 = sbr.rel (0) target = $region25
    $region24: #{tpu_custom_call.1} parent=1 // pred_region
      %34 = dma.done [#allocation3], 1536
    $region25: #{tpu_custom_call.1} parent=1 // pred_fallthru
      _
    %v36 = vld [vmem:[%s0] sm:$0xf]
    %v37 = vld [vmem:[%s1] sm:$0xf]
    %v38 = vld [vmem:[%s1 + $0x4] sm:$0xf]
    %v39 = vld [vmem:[%s1 + $0x8] sm:$0xf]
    %v40 = vld [vmem:[%s1 + $0xc] sm:$0xf]
    %v41 = vld [vmem:[%s2] sm:$0x1]
    %v42 = vld [vmem:[#allocation2] sm:$0xf]
    %v43 = vld [vmem:[#allocation2 + $0xc] sm:$0xf]
    %v44 = vld [vmem:[#allocation2 + $0x18] sm:$0xf]
    %v45 = vld [vmem:[#allocation2 + $0x24] sm:$0xf]
    %v46 = vld [vmem:[#allocation2 + $0x30] sm:$0xf]
    %v47 = vld [vmem:[#allocation2 + $0x3c] sm:$0xf]
    %v48 = vld [vmem:[#allocation2 + $0x48] sm:$0xf]
    %v49 = vld [vmem:[#allocation2 + $0x54] sm:$0xf]
    %v50 = vld [vmem:[#allocation2 + $0x4] sm:$0xf]
    %v51 = vld [vmem:[#allocation2 + $0x10] sm:$0xf]
    %v52 = vld [vmem:[#allocation2 + $0x1c] sm:$0xf]
    %v53 = vld [vmem:[#allocation2 + $0x28] sm:$0xf]
    %v54 = vld [vmem:[#allocation2 + $0x34] sm:$0xf]
    %v55 = vld [vmem:[#allocation2 + $0x40] sm:$0xf]
    %v56 = vld [vmem:[#allocation2 + $0x4c] sm:$0xf]
    %v57 = vld [vmem:[#allocation2 + $0x58] sm:$0xf]
    %v58 = vld [vmem:[#allocation2 + $0x8] sm:$0xf]
    %v59 = vld [vmem:[#allocation2 + $0x14] sm:$0xf]
    %v60 = vld [vmem:[#allocation2 + $0x20] sm:$0xf]
    %v61 = vld [vmem:[#allocation2 + $0x2c] sm:$0xf]
    %v62 = vld [vmem:[%s4] sm:$0x1]
    %v63 = vld [vmem:[%s4 + $0x1] sm:$0x1]
    %v64 = vld [vmem:[%s4 + $0x2] sm:$0x1]
    %v65 = vlaneseq
    %v66 = vshrl.u32 %v65, 7
    %v67 = vlaneseq
    %v68 = vshrl.u32 %v67, 7
    %v69 = vsub.s32 0, %v68
    %v70 = vrot.slane %v41, %v69
    %vm71 = vcmp.eq.s32.totalorder %v70, %v66
    %vm72 = vcmask 261120
    %v75 = vlaneseq
    %v76 = vshrl.u32 %v75, 7
    %v77 = vsub.s32 0, %v76
    %v78 = vrot.slane %v62, %v77
    %v88 = vunpack.c.l.b16 %v42
    %v89 = vunpack.c.l.b16 %v43
    %v90 = vunpack.c.l.b16 %v44
    %v91 = vunpack.c.l.b16 %v45
    %v92 = vunpack.c.l.b16 %v46
    %v93 = vunpack.c.l.b16 %v47
    %v94 = vunpack.c.l.b16 %v48
    %v95 = vunpack.c.l.b16 %v49
    %v96 = vpack.c.b16 %v89, %v88
    %v97 = vpack.c.b16 %v91, %v90
    %v98 = vpack.c.b16 %v93, %v92
    %v99 = vpack.c.b16 %v95, %v94
    %vm104 = vcmask 523264
    %v105 = vsel %vm104, 0, 0
    %107 = vmatprep.subr.bf16.mxu0 0
    %108 = vmatpush1.bf16.msra.mxu0 0
    %109 = vmatprep.subr.bf16.mxu0 0
    %110 = vmatpush1.bf16.msra.mxu0 0
    %111 = vmatprep.subr.bf16.mxu0 0
    %112 = vmatpush1.bf16.msra.mxu0 0
    %113 = vmatprep.subr.bf16.mxu0 0
    %114 = vmatpush1.bf16.msra.mxu0 0
    %115 = vmatprep.subr.bf16.mxu0 0
    %116 = vmatpush1.bf16.msra.mxu0 %v99
    %117 = vmatprep.subr.bf16.mxu0 0
    %118 = vmatpush1.bf16.msra.mxu0 %v98
    %119 = vmatprep.subr.bf16.mxu0 0
    %120 = vmatpush1.bf16.msra.mxu0 %v97
    %121 = vmatprep.subr.bf16.mxu0 0
    %122 = vmatpush1.bf16.msra.mxu0 %v96
    %123 = vmatprep.subr.bf16.mxu0 0
    %124 = vmatpush2.bf16.msra.mxu0 0
    %125 = vmatprep.subr.bf16.mxu0 0
    %126 = vmatpush2.bf16.msra.mxu0 0
    %127 = vmatprep.subr.bf16.mxu0 0
    %128 = vmatpush2.bf16.msra.mxu0 0
    %129 = vmatprep.subr.bf16.mxu0 0
    %130 = vmatpush2.bf16.msra.mxu0 0
    %131 = vmatprep.subr.bf16.mxu0 0
    %132 = vmatpush2.bf16.msra.mxu0 0
    %133 = vmatprep.subr.bf16.mxu0 0
    %134 = vmatpush2.bf16.msra.mxu0 0
    %135 = vmatprep.subr.bf16.mxu0 0
    %136 = vmatpush2.bf16.msra.mxu0 0
    %137 = vmatprep.subr.bf16.mxu0 0
    %138 = vmatpush2.bf16.msra.mxu0 0
    %139 = vmatprep.mubr.bf16.mxu0 0
    %140 = vmatmul.mubr.bf16.gmra.mxu0 %v105
    %v141 = vpop.f32.mrf.mxu0
    %v142 = vadd.f32 %v78, %v141
    %v143 = vpop.f32.mrf.mxu0
    %v144 = vpop.f32.mrf.mxu0
    %v145 = vpop.f32.mrf.mxu0
    %146 = vdwg.mxu0
    %v147 = vxor.u32 %v142, 2147483648
    %v148 = vmul.f32 %v147, 1.442695
    %v149 = vpow.pop %v148
    %v150 = vadd.f32 %v149, 1.0
    %v151 = vrcp.pop %v150
    %v152 = vmul.f32 1.0, %v151
    %v153 = vtanh.pop %v142
    %v154 = vmul.f32 %v152, 0.0
    %156 = vrot.lane.b32.xlu0 %v153, 64
    %v157 = vpop.permute.xlu0 %156
    %v159 = vmul.f32 %v152, %v157
    %161 = vrot.lane.b32.xlu0 %v159, 32
    %v162 = vpop.permute.xlu0 %161
    %v164 = vadd.f32 %v154, %v162
    %v165 = vtanh.pop %v164
    %167 = vrot.lane.b32.xlu0 %v165, 64
    %v168 = vpop.permute.xlu0 %167
    %v170 = vmul.f32 %v152, %v168
    %v171 = vpack.c.bf16 %v170, %v170
    %173 = vrot.lane.b32.xlu0 %v171, 32
    %v174 = vpop.permute.xlu0 %173
    %v179 = vunpack.c.l.b16 %v37
    %v180 = vunpack.c.l.b16 %v38
    %v181 = vunpack.c.l.b16 %v39
    %v182 = vunpack.c.l.b16 %v40
    %v183 = vpack.c.b16 %v180, %v179
    %v184 = vpack.c.b16 %v182, %v181
    %v188 = vsel %vm72, %v174, 0
    %190 = vmatprep.subr.bf16.mxu0 0
    %191 = vmatpush1.bf16.msra.mxu0 0
    %192 = vmatprep.subr.bf16.mxu0 0
    %193 = vmatpush1.bf16.msra.mxu0 0
    %194 = vmatprep.subr.bf16.mxu0 0
    %195 = vmatpush1.bf16.msra.mxu0 0
    %196 = vmatprep.subr.bf16.mxu0 0
    %197 = vmatpush1.bf16.msra.mxu0 0
    %198 = vmatprep.subr.bf16.mxu0 0
    %199 = vmatpush1.bf16.msra.mxu0 0
    %200 = vmatprep.subr.bf16.mxu0 0
    %201 = vmatpush1.bf16.msra.mxu0 0
    %202 = vmatprep.subr.bf16.mxu0 0
    %203 = vmatpush1.bf16.msra.mxu0 %v184
    %204 = vmatprep.subr.bf16.mxu0 0
    %205 = vmatpush1.bf16.msra.mxu0 %v183
    %206 = vmatprep.subr.bf16.mxu0 0
    %207 = vmatpush2.bf16.msra.mxu0 0
    %208 = vmatprep.subr.bf16.mxu0 0
    %209 = vmatpush2.bf16.msra.mxu0 0
    %210 = vmatprep.subr.bf16.mxu0 0
    %211 = vmatpush2.bf16.msra.mxu0 0
    %212 = vmatprep.subr.bf16.mxu0 0
    %213 = vmatpush2.bf16.msra.mxu0 0
    %214 = vmatprep.subr.bf16.mxu0 0
    %215 = vmatpush2.bf16.msra.mxu0 0
    %216 = vmatprep.subr.bf16.mxu0 0
    %217 = vmatpush2.bf16.msra.mxu0 0
    %218 = vmatprep.subr.bf16.mxu0 0
    %219 = vmatpush2.bf16.msra.mxu0 0
    %220 = vmatprep.subr.bf16.mxu0 0
    %221 = vmatpush2.bf16.msra.mxu0 0
    %222 = vmatprep.mubr.bf16.mxu0 0
    %223 = vmatmul.mubr.bf16.gmra.mxu0 %v188
    %v224 = vpop.f32.mrf.mxu0
    %v225 = vadd.f32 0.0, %v224
    %v226 = vpop.f32.mrf.mxu0
    %v227 = vpop.f32.mrf.mxu0
    %v228 = vpop.f32.mrf.mxu0
    %229 = vdwg.mxu0
    %v230 = vsel %vm71, %v225, -1e+30
    %vm231 = vcmask 58368
    %v232 = vsel %vm231, %v230, -inf
    %233 = vmax.xlane.f32.xlu0 %v232
    %v234 = vpop.xlane.xlu0 %233
    %v235 = vsub.f32 %v230, %v234
    %v236 = vmul.f32 %v235, 1.442695
    %v237 = vpow.pop %v236
    %v238 = vsel %vm231, %v237, 0.0
    %239 = vadd.xlane.f32.xlu0 %v238
    %v240 = vpop.xlane.xlu0 %239
    %v241 = vpack.c.bf16 %v237, %v237
    %vm242 = vcmask 64512
    %v244 = vsel %vm242, %v241, 0
    %vm246 = vcmask 1043456
    %v248 = vsel %vm246, %v36, 0
    %250 = vmatprep.subr.bf16.mxu0 0
    %251 = vmatpush1.bf16.msra.mxu0 0
    %252 = vmatprep.subr.bf16.mxu0 0
    %253 = vmatpush1.bf16.msra.mxu0 0
    %254 = vmatprep.subr.bf16.mxu0 0
    %255 = vmatpush1.bf16.msra.mxu0 0
    %256 = vmatprep.subr.bf16.mxu0 0
    %257 = vmatpush1.bf16.msra.mxu0 0
    %258 = vmatprep.subr.bf16.mxu0 0
    %259 = vmatpush1.bf16.msra.mxu0 0
    %260 = vmatprep.subr.bf16.mxu0 0
    %261 = vmatpush1.bf16.msra.mxu0 0
    %262 = vmatprep.subr.bf16.mxu0 0
    %263 = vmatpush1.bf16.msra.mxu0 0
    %264 = vmatprep.subr.bf16.mxu0 0
    %265 = vmatpush1.bf16.msra.mxu0 %v248
    %266 = vmatprep.subr.bf16.mxu0 0
    %267 = vmatpush2.bf16.msra.mxu0 0
    %268 = vmatprep.subr.bf16.mxu0 0
    %269 = vmatpush2.bf16.msra.mxu0 0
    %270 = vmatprep.subr.bf16.mxu0 0
    %271 = vmatpush2.bf16.msra.mxu0 0
    %272 = vmatprep.subr.bf16.mxu0 0
    %273 = vmatpush2.bf16.msra.mxu0 0
    %274 = vmatprep.subr.bf16.mxu0 0
    %275 = vmatpush2.bf16.msra.mxu0 0
    %276 = vmatprep.subr.bf16.mxu0 0
    %277 = vmatpush2.bf16.msra.mxu0 0
    %278 = vmatprep.subr.bf16.mxu0 0
    %279 = vmatpush2.bf16.msra.mxu0 0
    %280 = vmatprep.subr.bf16.mxu0 0
    %281 = vmatpush2.bf16.msra.mxu0 0
    %282 = vmatprep.mubr.bf16.mxu0 0
    %283 = vmatmul.mubr.bf16.gmra.mxu0 %v244
    %v284 = vpop.f32.mrf.mxu0
    %v285 = vadd.f32 0.0, %v284
    %v286 = vpop.f32.mrf.mxu0
    %v287 = vpop.f32.mrf.mxu0
    %v288 = vpop.f32.mrf.mxu0
    %289 = vdwg.mxu0
    %v290 = vrcp.pop %v240
    %v291 = vmul.f32 %v285, %v290
    %v292 = vpack.c.bf16 %v291, %v291
    %294 = vrot.lane.b32.xlu0 %v292, 32
    %v295 = vpop.permute.xlu0 %294
    %v297 = vsel %vm72, %v174, %v295
    %v298 = vsel %vm104, %v297, 0
    %300 = vmatprep.subr.bf16.mxu0 0
    %301 = vmatpush1.bf16.msra.mxu0 0
    %302 = vmatprep.subr.bf16.mxu0 0
    %303 = vmatpush1.bf16.msra.mxu0 0
    %304 = vmatprep.subr.bf16.mxu0 0
    %305 = vmatpush1.bf16.msra.mxu0 0
    %306 = vmatprep.subr.bf16.mxu0 0
    %307 = vmatpush1.bf16.msra.mxu0 0
    %308 = vmatprep.subr.bf16.mxu0 0
    %309 = vmatpush1.bf16.msra.mxu0 %v99
    %310 = vmatprep.subr.bf16.mxu0 0
    %311 = vmatpush1.bf16.msra.mxu0 %v98
    %312 = vmatprep.subr.bf16.mxu0 0
    %313 = vmatpush1.bf16.msra.mxu0 %v97
    %314 = vmatprep.subr.bf16.mxu0 0
    %315 = vmatpush1.bf16.msra.mxu0 %v96
    %316 = vmatprep.subr.bf16.mxu0 0
    %317 = vmatpush2.bf16.msra.mxu0 0
    %318 = vmatprep.subr.bf16.mxu0 0
    %319 = vmatpush2.bf16.msra.mxu0 0
    %320 = vmatprep.subr.bf16.mxu0 0
    %321 = vmatpush2.bf16.msra.mxu0 0
    %322 = vmatprep.subr.bf16.mxu0 0
    %323 = vmatpush2.bf16.msra.mxu0 0
    %324 = vmatprep.subr.bf16.mxu0 0
    %325 = vmatpush2.bf16.msra.mxu0 0
    %326 = vmatprep.subr.bf16.mxu0 0
    %327 = vmatpush2.bf16.msra.mxu0 0
    %328 = vmatprep.subr.bf16.mxu0 0
    %329 = vmatpush2.bf16.msra.mxu0 0
    %330 = vmatprep.subr.bf16.mxu0 0
    %331 = vmatpush2.bf16.msra.mxu0 0
    %332 = vmatprep.mubr.bf16.mxu0 0
    %333 = vmatmul.mubr.bf16.gmra.mxu0 %v298
    %v334 = vpop.f32.mrf.mxu0
    %v335 = vadd.f32 %v78, %v334
    %v336 = vpop.f32.mrf.mxu0
    %v337 = vpop.f32.mrf.mxu0
    %v338 = vpop.f32.mrf.mxu0
    %339 = vdwg.mxu0
    %v340 = vxor.u32 %v335, 2147483648
    %v341 = vmul.f32 %v340, 1.442695
    %v342 = vpow.pop %v341
    %v343 = vadd.f32 %v342, 1.0
    %v344 = vrcp.pop %v343
    %v345 = vmul.f32 1.0, %v344
    %v346 = vtanh.pop %v335
    %v347 = vmul.f32 %v345, %v164
    %349 = vrot.lane.b32.xlu0 %v346, 64
    %v350 = vpop.permute.xlu0 %349
    %v352 = vmul.f32 %v345, %v350
    %354 = vrot.lane.b32.xlu0 %v352, 32
    %v355 = vpop.permute.xlu0 %354
    %v357 = vadd.f32 %v347, %v355
    %v358 = vtanh.pop %v357
    %360 = vrot.lane.b32.xlu0 %v358, 64
    %v361 = vpop.permute.xlu0 %360
    %v363 = vmul.f32 %v345, %v361
    %v364 = vpack.c.bf16 %v363, %v363
    %366 = vrot.lane.b32.xlu0 %v364, 32
    %v367 = vpop.permute.xlu0 %366
    %v369 = vsel %vm72, %v367, 0
    %371 = vmatprep.subr.bf16.mxu0 0
    %372 = vmatpush1.bf16.msra.mxu0 0
    %373 = vmatprep.subr.bf16.mxu0 0
    %374 = vmatpush1.bf16.msra.mxu0 0
    %375 = vmatprep.subr.bf16.mxu0 0
    %376 = vmatpush1.bf16.msra.mxu0 0
    %377 = vmatprep.subr.bf16.mxu0 0
    %378 = vmatpush1.bf16.msra.mxu0 0
    %379 = vmatprep.subr.bf16.mxu0 0
    %380 = vmatpush1.bf16.msra.mxu0 0
    %381 = vmatprep.subr.bf16.mxu0 0
    %382 = vmatpush1.bf16.msra.mxu0 0
    %383 = vmatprep.subr.bf16.mxu0 0
    %384 = vmatpush1.bf16.msra.mxu0 %v184
    %385 = vmatprep.subr.bf16.mxu0 0
    %386 = vmatpush1.bf16.msra.mxu0 %v183
    %387 = vmatprep.subr.bf16.mxu0 0
    %388 = vmatpush2.bf16.msra.mxu0 0
    %389 = vmatprep.subr.bf16.mxu0 0
    %390 = vmatpush2.bf16.msra.mxu0 0
    %391 = vmatprep.subr.bf16.mxu0 0
    %392 = vmatpush2.bf16.msra.mxu0 0
    %393 = vmatprep.subr.bf16.mxu0 0
    %394 = vmatpush2.bf16.msra.mxu0 0
    %395 = vmatprep.subr.bf16.mxu0 0
    %396 = vmatpush2.bf16.msra.mxu0 0
    %397 = vmatprep.subr.bf16.mxu0 0
    %398 = vmatpush2.bf16.msra.mxu0 0
    %399 = vmatprep.subr.bf16.mxu0 0
    %400 = vmatpush2.bf16.msra.mxu0 0
    %401 = vmatprep.subr.bf16.mxu0 0
    %402 = vmatpush2.bf16.msra.mxu0 0
    %403 = vmatprep.mubr.bf16.mxu0 0
    %404 = vmatmul.mubr.bf16.gmra.mxu0 %v369
    %v405 = vpop.f32.mrf.mxu0
    %v406 = vadd.f32 0.0, %v405
    %v407 = vpop.f32.mrf.mxu0
    %v408 = vpop.f32.mrf.mxu0
    %v409 = vpop.f32.mrf.mxu0
    %410 = vdwg.mxu0
    %v411 = vsel %vm71, %v406, -1e+30
    %v412 = vsel %vm231, %v411, -inf
    %413 = vmax.xlane.f32.xlu0 %v412
    %v414 = vpop.xlane.xlu0 %413
    %v415 = vsub.f32 %v411, %v414
    %v416 = vmul.f32 %v415, 1.442695
    %v417 = vpow.pop %v416
    %v418 = vsel %vm231, %v417, 0.0
    %419 = vadd.xlane.f32.xlu0 %v418
    %v420 = vpop.xlane.xlu0 %419
    %v421 = vpack.c.bf16 %v417, %v417
    %v423 = vsel %vm242, %v421, 0
    %425 = vmatprep.subr.bf16.mxu0 0
    %426 = vmatpush1.bf16.msra.mxu0 0
    %427 = vmatprep.subr.bf16.mxu0 0
    %428 = vmatpush1.bf16.msra.mxu0 0
    %429 = vmatprep.subr.bf16.mxu0 0
    %430 = vmatpush1.bf16.msra.mxu0 0
    %431 = vmatprep.subr.bf16.mxu0 0
    %432 = vmatpush1.bf16.msra.mxu0 0
    %433 = vmatprep.subr.bf16.mxu0 0
    %434 = vmatpush1.bf16.msra.mxu0 0
    %435 = vmatprep.subr.bf16.mxu0 0
    %436 = vmatpush1.bf16.msra.mxu0 0
    %437 = vmatprep.subr.bf16.mxu0 0
    %438 = vmatpush1.bf16.msra.mxu0 0
    %439 = vmatprep.subr.bf16.mxu0 0
    %440 = vmatpush1.bf16.msra.mxu0 %v248
    %441 = vmatprep.subr.bf16.mxu0 0
    %442 = vmatpush2.bf16.msra.mxu0 0
    %443 = vmatprep.subr.bf16.mxu0 0
    %444 = vmatpush2.bf16.msra.mxu0 0
    %445 = vmatprep.subr.bf16.mxu0 0
    %446 = vmatpush2.bf16.msra.mxu0 0
    %447 = vmatprep.subr.bf16.mxu0 0
    %448 = vmatpush2.bf16.msra.mxu0 0
    %449 = vmatprep.subr.bf16.mxu0 0
    %450 = vmatpush2.bf16.msra.mxu0 0
    %451 = vmatprep.subr.bf16.mxu0 0
    %452 = vmatpush2.bf16.msra.mxu0 0
    %453 = vmatprep.subr.bf16.mxu0 0
    %454 = vmatpush2.bf16.msra.mxu0 0
    %455 = vmatprep.subr.bf16.mxu0 0
    %456 = vmatpush2.bf16.msra.mxu0 0
    %457 = vmatprep.mubr.bf16.mxu0 0
    %458 = vmatmul.mubr.bf16.gmra.mxu0 %v423
    %v459 = vpop.f32.mrf.mxu0
    %v460 = vadd.f32 0.0, %v459
    %v461 = vpop.f32.mrf.mxu0
    %v462 = vpop.f32.mrf.mxu0
    %v463 = vpop.f32.mrf.mxu0
    %464 = vdwg.mxu0
    %v465 = vrcp.pop %v420
    %v466 = vmul.f32 %v460, %v465
    %v467 = vpack.c.bf16 %v466, %v466
    %469 = vrot.lane.b32.xlu0 %v467, 32
    %v470 = vpop.permute.xlu0 %469
    %v472 = vsel %vm72, %v367, %v470
    %v473 = vsel %vm104, %v472, 0
    %475 = vmatprep.subr.bf16.mxu0 0
    %476 = vmatpush1.bf16.msra.mxu0 0
    %477 = vmatprep.subr.bf16.mxu0 0
    %478 = vmatpush1.bf16.msra.mxu0 0
    %479 = vmatprep.subr.bf16.mxu0 0
    %480 = vmatpush1.bf16.msra.mxu0 0
    %481 = vmatprep.subr.bf16.mxu0 0
    %482 = vmatpush1.bf16.msra.mxu0 0
    %483 = vmatprep.subr.bf16.mxu0 0
    %484 = vmatpush1.bf16.msra.mxu0 %v99
    %485 = vmatprep.subr.bf16.mxu0 0
    %486 = vmatpush1.bf16.msra.mxu0 %v98
    %487 = vmatprep.subr.bf16.mxu0 0
    %488 = vmatpush1.bf16.msra.mxu0 %v97
    %489 = vmatprep.subr.bf16.mxu0 0
    %490 = vmatpush1.bf16.msra.mxu0 %v96
    %491 = vmatprep.subr.bf16.mxu0 0
    %492 = vmatpush2.bf16.msra.mxu0 0
    %493 = vmatprep.subr.bf16.mxu0 0
    %494 = vmatpush2.bf16.msra.mxu0 0
    %495 = vmatprep.subr.bf16.mxu0 0
    %496 = vmatpush2.bf16.msra.mxu0 0
    %497 = vmatprep.subr.bf16.mxu0 0
    %498 = vmatpush2.bf16.msra.mxu0 0
    %499 = vmatprep.subr.bf16.mxu0 0
    %500 = vmatpush2.bf16.msra.mxu0 0
    %501 = vmatprep.subr.bf16.mxu0 0
    %502 = vmatpush2.bf16.msra.mxu0 0
    %503 = vmatprep.subr.bf16.mxu0 0
    %504 = vmatpush2.bf16.msra.mxu0 0
    %505 = vmatprep.subr.bf16.mxu0 0
    %506 = vmatpush2.bf16.msra.mxu0 0
    %507 = vmatprep.mubr.bf16.mxu0 0
    %508 = vmatmul.mubr.bf16.gmra.mxu0 %v473
    %v509 = vpop.f32.mrf.mxu0
    %v510 = vadd.f32 %v78, %v509
    %v511 = vpop.f32.mrf.mxu0
    %v512 = vpop.f32.mrf.mxu0
    %v513 = vpop.f32.mrf.mxu0
    %514 = vdwg.mxu0
    %v515 = vxor.u32 %v510, 2147483648
    %v516 = vmul.f32 %v515, 1.442695
    %v517 = vpow.pop %v516
    %v518 = vadd.f32 %v517, 1.0
    %v519 = vrcp.pop %v518
    %v520 = vmul.f32 1.0, %v519
    %v521 = vtanh.pop %v510
    %v522 = vmul.f32 %v520, %v357
    %524 = vrot.lane.b32.xlu0 %v521, 64
    %v525 = vpop.permute.xlu0 %524
    %v527 = vmul.f32 %v520, %v525
    %529 = vrot.lane.b32.xlu0 %v527, 32
    %v530 = vpop.permute.xlu0 %529
    %v532 = vadd.f32 %v522, %v530
    %v533 = vtanh.pop %v532
    %535 = vrot.lane.b32.xlu0 %v533, 64
    %v536 = vpop.permute.xlu0 %535
    %v538 = vmul.f32 %v520, %v536
    %v539 = vpack.c.bf16 %v538, %v538
    %541 = vrot.lane.b32.xlu0 %v539, 32
    %v542 = vpop.permute.xlu0 %541
    %v544 = vsel %vm72, %v542, 0
    %546 = vmatprep.subr.bf16.mxu0 0
    %547 = vmatpush1.bf16.msra.mxu0 0
    %548 = vmatprep.subr.bf16.mxu0 0
    %549 = vmatpush1.bf16.msra.mxu0 0
    %550 = vmatprep.subr.bf16.mxu0 0
    %551 = vmatpush1.bf16.msra.mxu0 0
    %552 = vmatprep.subr.bf16.mxu0 0
    %553 = vmatpush1.bf16.msra.mxu0 0
    %554 = vmatprep.subr.bf16.mxu0 0
    %555 = vmatpush1.bf16.msra.mxu0 0
    %556 = vmatprep.subr.bf16.mxu0 0
    %557 = vmatpush1.bf16.msra.mxu0 0
    %558 = vmatprep.subr.bf16.mxu0 0
    %559 = vmatpush1.bf16.msra.mxu0 %v184
    %560 = vmatprep.subr.bf16.mxu0 0
    %561 = vmatpush1.bf16.msra.mxu0 %v183
    %562 = vmatprep.subr.bf16.mxu0 0
    %563 = vmatpush2.bf16.msra.mxu0 0
    %564 = vmatprep.subr.bf16.mxu0 0
    %565 = vmatpush2.bf16.msra.mxu0 0
    %566 = vmatprep.subr.bf16.mxu0 0
    %567 = vmatpush2.bf16.msra.mxu0 0
    %568 = vmatprep.subr.bf16.mxu0 0
    %569 = vmatpush2.bf16.msra.mxu0 0
    %570 = vmatprep.subr.bf16.mxu0 0
    %571 = vmatpush2.bf16.msra.mxu0 0
    %572 = vmatprep.subr.bf16.mxu0 0
    %573 = vmatpush2.bf16.msra.mxu0 0
    %574 = vmatprep.subr.bf16.mxu0 0
    %575 = vmatpush2.bf16.msra.mxu0 0
    %576 = vmatprep.subr.bf16.mxu0 0
    %577 = vmatpush2.bf16.msra.mxu0 0
    %578 = vmatprep.mubr.bf16.mxu0 0
    %579 = vmatmul.mubr.bf16.gmra.mxu0 %v544
    %v580 = vpop.f32.mrf.mxu0
    %v581 = vadd.f32 0.0, %v580
    %v582 = vpop.f32.mrf.mxu0
    %v583 = vpop.f32.mrf.mxu0
    %v584 = vpop.f32.mrf.mxu0
    %585 = vdwg.mxu0
    %v586 = vsel %vm71, %v581, -1e+30
    %v587 = vsel %vm231, %v586, -inf
    %588 = vmax.xlane.f32.xlu0 %v587
    %v589 = vpop.xlane.xlu0 %588
    %v590 = vsub.f32 %v586, %v589
    %v591 = vmul.f32 %v590, 1.442695
    %v592 = vpow.pop %v591
    %v593 = vsel %vm231, %v592, 0.0
    %594 = vadd.xlane.f32.xlu0 %v593
    %v595 = vpop.xlane.xlu0 %594
    %v596 = vpack.c.bf16 %v592, %v592
    %v598 = vsel %vm242, %v596, 0
    %600 = vmatprep.subr.bf16.mxu0 0
    %601 = vmatpush1.bf16.msra.mxu0 0
    %602 = vmatprep.subr.bf16.mxu0 0
    %603 = vmatpush1.bf16.msra.mxu0 0
    %604 = vmatprep.subr.bf16.mxu0 0
    %605 = vmatpush1.bf16.msra.mxu0 0
    %606 = vmatprep.subr.bf16.mxu0 0
    %607 = vmatpush1.bf16.msra.mxu0 0
    %608 = vmatprep.subr.bf16.mxu0 0
    %609 = vmatpush1.bf16.msra.mxu0 0
    %610 = vmatprep.subr.bf16.mxu0 0
    %611 = vmatpush1.bf16.msra.mxu0 0
    %612 = vmatprep.subr.bf16.mxu0 0
    %613 = vmatpush1.bf16.msra.mxu0 0
    %614 = vmatprep.subr.bf16.mxu0 0
    %615 = vmatpush1.bf16.msra.mxu0 %v248
    %616 = vmatprep.subr.bf16.mxu0 0
    %617 = vmatpush2.bf16.msra.mxu0 0
    %618 = vmatprep.subr.bf16.mxu0 0
    %619 = vmatpush2.bf16.msra.mxu0 0
    %620 = vmatprep.subr.bf16.mxu0 0
    %621 = vmatpush2.bf16.msra.mxu0 0
    %622 = vmatprep.subr.bf16.mxu0 0
    %623 = vmatpush2.bf16.msra.mxu0 0
    %624 = vmatprep.subr.bf16.mxu0 0
    %625 = vmatpush2.bf16.msra.mxu0 0
    %626 = vmatprep.subr.bf16.mxu0 0
    %627 = vmatpush2.bf16.msra.mxu0 0
    %628 = vmatprep.subr.bf16.mxu0 0
    %629 = vmatpush2.bf16.msra.mxu0 0
    %630 = vmatprep.subr.bf16.mxu0 0
    %631 = vmatpush2.bf16.msra.mxu0 0
    %632 = vmatprep.mubr.bf16.mxu0 0
    %633 = vmatmul.mubr.bf16.gmra.mxu0 %v598
    %v634 = vpop.f32.mrf.mxu0
    %v635 = vadd.f32 0.0, %v634
    %v636 = vpop.f32.mrf.mxu0
    %v637 = vpop.f32.mrf.mxu0
    %v638 = vpop.f32.mrf.mxu0
    %639 = vdwg.mxu0
    %v640 = vrcp.pop %v595
    %v641 = vmul.f32 %v635, %v640
    %v642 = vpack.c.bf16 %v641, %v641
    %644 = vrot.lane.b32.xlu0 %v642, 32
    %v645 = vpop.permute.xlu0 %644
    %v647 = vsel %vm72, %v542, %v645
    %v648 = vsel %vm104, %v647, 0
    %650 = vmatprep.subr.bf16.mxu0 0
    %651 = vmatpush1.bf16.msra.mxu0 0
    %652 = vmatprep.subr.bf16.mxu0 0
    %653 = vmatpush1.bf16.msra.mxu0 0
    %654 = vmatprep.subr.bf16.mxu0 0
    %655 = vmatpush1.bf16.msra.mxu0 0
    %656 = vmatprep.subr.bf16.mxu0 0
    %657 = vmatpush1.bf16.msra.mxu0 0
    %658 = vmatprep.subr.bf16.mxu0 0
    %659 = vmatpush1.bf16.msra.mxu0 %v99
    %660 = vmatprep.subr.bf16.mxu0 0
    %661 = vmatpush1.bf16.msra.mxu0 %v98
    %662 = vmatprep.subr.bf16.mxu0 0
    %663 = vmatpush1.bf16.msra.mxu0 %v97
    %664 = vmatprep.subr.bf16.mxu0 0
    %665 = vmatpush1.bf16.msra.mxu0 %v96
    %666 = vmatprep.subr.bf16.mxu0 0
    %667 = vmatpush2.bf16.msra.mxu0 0
    %668 = vmatprep.subr.bf16.mxu0 0
    %669 = vmatpush2.bf16.msra.mxu0 0
    %670 = vmatprep.subr.bf16.mxu0 0
    %671 = vmatpush2.bf16.msra.mxu0 0
    %672 = vmatprep.subr.bf16.mxu0 0
    %673 = vmatpush2.bf16.msra.mxu0 0
    %674 = vmatprep.subr.bf16.mxu0 0
    %675 = vmatpush2.bf16.msra.mxu0 0
    %676 = vmatprep.subr.bf16.mxu0 0
    %677 = vmatpush2.bf16.msra.mxu0 0
    %678 = vmatprep.subr.bf16.mxu0 0
    %679 = vmatpush2.bf16.msra.mxu0 0
    %680 = vmatprep.subr.bf16.mxu0 0
    %681 = vmatpush2.bf16.msra.mxu0 0
    %682 = vmatprep.mubr.bf16.mxu0 0
    %683 = vmatmul.mubr.bf16.gmra.mxu0 %v648
    %v684 = vpop.f32.mrf.mxu0
    %v685 = vadd.f32 %v78, %v684
    %v686 = vpop.f32.mrf.mxu0
    %v687 = vpop.f32.mrf.mxu0
    %v688 = vpop.f32.mrf.mxu0
    %689 = vdwg.mxu0
    %v690 = vxor.u32 %v685, 2147483648
    %v691 = vmul.f32 %v690, 1.442695
    %v692 = vpow.pop %v691
    %v693 = vadd.f32 %v692, 1.0
    %v694 = vrcp.pop %v693
    %v695 = vmul.f32 1.0, %v694
    %v696 = vtanh.pop %v685
    %v697 = vmul.f32 %v695, %v532
    %699 = vrot.lane.b32.xlu0 %v696, 64
    %v700 = vpop.permute.xlu0 %699
    %v702 = vmul.f32 %v695, %v700
    %704 = vrot.lane.b32.xlu0 %v702, 32
    %v705 = vpop.permute.xlu0 %704
    %v707 = vadd.f32 %v697, %v705
    %v708 = vtanh.pop %v707
    %710 = vrot.lane.b32.xlu0 %v708, 64
    %v711 = vpop.permute.xlu0 %710
    %v713 = vmul.f32 %v695, %v711
    %v714 = vpack.c.bf16 %v713, %v713
    %716 = vrot.lane.b32.xlu0 %v714, 32
    %v717 = vpop.permute.xlu0 %716
    %v719 = vsel %vm72, %v717, 0
    %721 = vmatprep.subr.bf16.mxu0 0
    %722 = vmatpush1.bf16.msra.mxu0 0
    %723 = vmatprep.subr.bf16.mxu0 0
    %724 = vmatpush1.bf16.msra.mxu0 0
    %725 = vmatprep.subr.bf16.mxu0 0
    %726 = vmatpush1.bf16.msra.mxu0 0
    %727 = vmatprep.subr.bf16.mxu0 0
    %728 = vmatpush1.bf16.msra.mxu0 0
    %729 = vmatprep.subr.bf16.mxu0 0
    %730 = vmatpush1.bf16.msra.mxu0 0
    %731 = vmatprep.subr.bf16.mxu0 0
    %732 = vmatpush1.bf16.msra.mxu0 0
    %733 = vmatprep.subr.bf16.mxu0 0
    %734 = vmatpush1.bf16.msra.mxu0 %v184
    %735 = vmatprep.subr.bf16.mxu0 0
    %736 = vmatpush1.bf16.msra.mxu0 %v183
    %737 = vmatprep.subr.bf16.mxu0 0
    %738 = vmatpush2.bf16.msra.mxu0 0
    %739 = vmatprep.subr.bf16.mxu0 0
    %740 = vmatpush2.bf16.msra.mxu0 0
    %741 = vmatprep.subr.bf16.mxu0 0
    %742 = vmatpush2.bf16.msra.mxu0 0
    %743 = vmatprep.subr.bf16.mxu0 0
    %744 = vmatpush2.bf16.msra.mxu0 0
    %745 = vmatprep.subr.bf16.mxu0 0
    %746 = vmatpush2.bf16.msra.mxu0 0
    %747 = vmatprep.subr.bf16.mxu0 0
    %748 = vmatpush2.bf16.msra.mxu0 0
    %749 = vmatprep.subr.bf16.mxu0 0
    %750 = vmatpush2.bf16.msra.mxu0 0
    %751 = vmatprep.subr.bf16.mxu0 0
    %752 = vmatpush2.bf16.msra.mxu0 0
    %753 = vmatprep.mubr.bf16.mxu0 0
    %754 = vmatmul.mubr.bf16.gmra.mxu0 %v719
    %v755 = vpop.f32.mrf.mxu0
    %v756 = vadd.f32 0.0, %v755
    %v757 = vpop.f32.mrf.mxu0
    %v758 = vpop.f32.mrf.mxu0
    %v759 = vpop.f32.mrf.mxu0
    %760 = vdwg.mxu0
    %v761 = vsel %vm71, %v756, -1e+30
    %v762 = vsel %vm231, %v761, -inf
    %763 = vmax.xlane.f32.xlu0 %v762
    %v764 = vpop.xlane.xlu0 %763
    %v765 = vsub.f32 %v761, %v764
    %v766 = vmul.f32 %v765, 1.442695
    %v767 = vpow.pop %v766
    %v768 = vsel %vm231, %v767, 0.0
    %769 = vadd.xlane.f32.xlu0 %v768
    %v770 = vpop.xlane.xlu0 %769
    %v771 = vpack.c.bf16 %v767, %v767
    %v773 = vsel %vm242, %v771, 0
    %775 = vmatprep.subr.bf16.mxu0 0
    %776 = vmatpush1.bf16.msra.mxu0 0
    %777 = vmatprep.subr.bf16.mxu0 0
    %778 = vmatpush1.bf16.msra.mxu0 0
    %779 = vmatprep.subr.bf16.mxu0 0
    %780 = vmatpush1.bf16.msra.mxu0 0
    %781 = vmatprep.subr.bf16.mxu0 0
    %782 = vmatpush1.bf16.msra.mxu0 0
    %783 = vmatprep.subr.bf16.mxu0 0
    %784 = vmatpush1.bf16.msra.mxu0 0
    %785 = vmatprep.subr.bf16.mxu0 0
    %786 = vmatpush1.bf16.msra.mxu0 0
    %787 = vmatprep.subr.bf16.mxu0 0
    %788 = vmatpush1.bf16.msra.mxu0 0
    %789 = vmatprep.subr.bf16.mxu0 0
    %790 = vmatpush1.bf16.msra.mxu0 %v248
    %791 = vmatprep.subr.bf16.mxu0 0
    %792 = vmatpush2.bf16.msra.mxu0 0
    %793 = vmatprep.subr.bf16.mxu0 0
    %794 = vmatpush2.bf16.msra.mxu0 0
    %795 = vmatprep.subr.bf16.mxu0 0
    %796 = vmatpush2.bf16.msra.mxu0 0
    %797 = vmatprep.subr.bf16.mxu0 0
    %798 = vmatpush2.bf16.msra.mxu0 0
    %799 = vmatprep.subr.bf16.mxu0 0
    %800 = vmatpush2.bf16.msra.mxu0 0
    %801 = vmatprep.subr.bf16.mxu0 0
    %802 = vmatpush2.bf16.msra.mxu0 0
    %803 = vmatprep.subr.bf16.mxu0 0
    %804 = vmatpush2.bf16.msra.mxu0 0
    %805 = vmatprep.subr.bf16.mxu0 0
    %806 = vmatpush2.bf16.msra.mxu0 0
    %807 = vmatprep.mubr.bf16.mxu0 0
    %808 = vmatmul.mubr.bf16.gmra.mxu0 %v773
    %v809 = vpop.f32.mrf.mxu0
    %v810 = vadd.f32 0.0, %v809
    %v811 = vpop.f32.mrf.mxu0
    %v812 = vpop.f32.mrf.mxu0
    %v813 = vpop.f32.mrf.mxu0
    %814 = vdwg.mxu0
    %v815 = vrcp.pop %v770
    %v816 = vmul.f32 %v810, %v815
    %v817 = vpack.c.bf16 %v816, %v816
    %819 = vrot.lane.b32.xlu0 %v817, 32
    %v820 = vpop.permute.xlu0 %819
    %v822 = vsel %vm72, %v717, %v820
    %v823 = vsel %vm104, %v822, 0
    %825 = vmatprep.subr.bf16.mxu0 0
    %826 = vmatpush1.bf16.msra.mxu0 0
    %827 = vmatprep.subr.bf16.mxu0 0
    %828 = vmatpush1.bf16.msra.mxu0 0
    %829 = vmatprep.subr.bf16.mxu0 0
    %830 = vmatpush1.bf16.msra.mxu0 0
    %831 = vmatprep.subr.bf16.mxu0 0
    %832 = vmatpush1.bf16.msra.mxu0 0
    %833 = vmatprep.subr.bf16.mxu0 0
    %834 = vmatpush1.bf16.msra.mxu0 %v99
    %835 = vmatprep.subr.bf16.mxu0 0
    %836 = vmatpush1.bf16.msra.mxu0 %v98
    %837 = vmatprep.subr.bf16.mxu0 0
    %838 = vmatpush1.bf16.msra.mxu0 %v97
    %839 = vmatprep.subr.bf16.mxu0 0
    %840 = vmatpush1.bf16.msra.mxu0 %v96
    %841 = vmatprep.subr.bf16.mxu0 0
    %842 = vmatpush2.bf16.msra.mxu0 0
    %843 = vmatprep.subr.bf16.mxu0 0
    %844 = vmatpush2.bf16.msra.mxu0 0
    %845 = vmatprep.subr.bf16.mxu0 0
    %846 = vmatpush2.bf16.msra.mxu0 0
    %847 = vmatprep.subr.bf16.mxu0 0
    %848 = vmatpush2.bf16.msra.mxu0 0
    %849 = vmatprep.subr.bf16.mxu0 0
    %850 = vmatpush2.bf16.msra.mxu0 0
    %851 = vmatprep.subr.bf16.mxu0 0
    %852 = vmatpush2.bf16.msra.mxu0 0
    %853 = vmatprep.subr.bf16.mxu0 0
    %854 = vmatpush2.bf16.msra.mxu0 0
    %855 = vmatprep.subr.bf16.mxu0 0
    %856 = vmatpush2.bf16.msra.mxu0 0
    %857 = vmatprep.mubr.bf16.mxu0 0
    %858 = vmatmul.mubr.bf16.gmra.mxu0 %v823
    %v859 = vpop.f32.mrf.mxu0
    %v860 = vadd.f32 %v78, %v859
    %v861 = vpop.f32.mrf.mxu0
    %v862 = vpop.f32.mrf.mxu0
    %v863 = vpop.f32.mrf.mxu0
    %864 = vdwg.mxu0
    %v865 = vxor.u32 %v860, 2147483648
    %v866 = vmul.f32 %v865, 1.442695
    %v867 = vpow.pop %v866
    %v868 = vadd.f32 %v867, 1.0
    %v869 = vrcp.pop %v868
    %v870 = vmul.f32 1.0, %v869
    %v871 = vtanh.pop %v860
    %v872 = vmul.f32 %v870, %v707
    %874 = vrot.lane.b32.xlu0 %v871, 64
    %v875 = vpop.permute.xlu0 %874
    %v877 = vmul.f32 %v870, %v875
    %879 = vrot.lane.b32.xlu0 %v877, 32
    %v880 = vpop.permute.xlu0 %879
    %v882 = vadd.f32 %v872, %v880
    %v883 = vtanh.pop %v882
    %885 = vrot.lane.b32.xlu0 %v883, 64
    %v886 = vpop.permute.xlu0 %885
    %v888 = vmul.f32 %v870, %v886
    %v889 = vpack.c.bf16 %v888, %v888
    %891 = vrot.lane.b32.xlu0 %v889, 32
    %v892 = vpop.permute.xlu0 %891
    %v894 = vsel %vm72, %v892, 0
    %896 = vmatprep.subr.bf16.mxu0 0
    %897 = vmatpush1.bf16.msra.mxu0 0
    %898 = vmatprep.subr.bf16.mxu0 0
    %899 = vmatpush1.bf16.msra.mxu0 0
    %900 = vmatprep.subr.bf16.mxu0 0
    %901 = vmatpush1.bf16.msra.mxu0 0
    %902 = vmatprep.subr.bf16.mxu0 0
    %903 = vmatpush1.bf16.msra.mxu0 0
    %904 = vmatprep.subr.bf16.mxu0 0
    %905 = vmatpush1.bf16.msra.mxu0 0
    %906 = vmatprep.subr.bf16.mxu0 0
    %907 = vmatpush1.bf16.msra.mxu0 0
    %908 = vmatprep.subr.bf16.mxu0 0
    %909 = vmatpush1.bf16.msra.mxu0 %v184
    %910 = vmatprep.subr.bf16.mxu0 0
    %911 = vmatpush1.bf16.msra.mxu0 %v183
    %912 = vmatprep.subr.bf16.mxu0 0
    %913 = vmatpush2.bf16.msra.mxu0 0
    %914 = vmatprep.subr.bf16.mxu0 0
    %915 = vmatpush2.bf16.msra.mxu0 0
    %916 = vmatprep.subr.bf16.mxu0 0
    %917 = vmatpush2.bf16.msra.mxu0 0
    %918 = vmatprep.subr.bf16.mxu0 0
    %919 = vmatpush2.bf16.msra.mxu0 0
    %920 = vmatprep.subr.bf16.mxu0 0
    %921 = vmatpush2.bf16.msra.mxu0 0
    %922 = vmatprep.subr.bf16.mxu0 0
    %923 = vmatpush2.bf16.msra.mxu0 0
    %924 = vmatprep.subr.bf16.mxu0 0
    %925 = vmatpush2.bf16.msra.mxu0 0
    %926 = vmatprep.subr.bf16.mxu0 0
    %927 = vmatpush2.bf16.msra.mxu0 0
    %928 = vmatprep.mubr.bf16.mxu0 0
    %929 = vmatmul.mubr.bf16.gmra.mxu0 %v894
    %v930 = vpop.f32.mrf.mxu0
    %v931 = vadd.f32 0.0, %v930
    %v932 = vpop.f32.mrf.mxu0
    %v933 = vpop.f32.mrf.mxu0
    %v934 = vpop.f32.mrf.mxu0
    %935 = vdwg.mxu0
    %v936 = vsel %vm71, %v931, -1e+30
    %v937 = vsel %vm231, %v936, -inf
    %938 = vmax.xlane.f32.xlu0 %v937
    %v939 = vpop.xlane.xlu0 %938
    %v940 = vsub.f32 %v936, %v939
    %v941 = vmul.f32 %v940, 1.442695
    %v942 = vpow.pop %v941
    %v943 = vsel %vm231, %v942, 0.0
    %944 = vadd.xlane.f32.xlu0 %v943
    %v945 = vpop.xlane.xlu0 %944
    %v946 = vpack.c.bf16 %v942, %v942
    %v948 = vsel %vm242, %v946, 0
    %950 = vmatprep.subr.bf16.mxu0 0
    %951 = vmatpush1.bf16.msra.mxu0 0
    %952 = vmatprep.subr.bf16.mxu0 0
    %953 = vmatpush1.bf16.msra.mxu0 0
    %954 = vmatprep.subr.bf16.mxu0 0
    %955 = vmatpush1.bf16.msra.mxu0 0
    %956 = vmatprep.subr.bf16.mxu0 0
    %957 = vmatpush1.bf16.msra.mxu0 0
    %958 = vmatprep.subr.bf16.mxu0 0
    %959 = vmatpush1.bf16.msra.mxu0 0
    %960 = vmatprep.subr.bf16.mxu0 0
    %961 = vmatpush1.bf16.msra.mxu0 0
    %962 = vmatprep.subr.bf16.mxu0 0
    %963 = vmatpush1.bf16.msra.mxu0 0
    %964 = vmatprep.subr.bf16.mxu0 0
    %965 = vmatpush1.bf16.msra.mxu0 %v248
    %966 = vmatprep.subr.bf16.mxu0 0
    %967 = vmatpush2.bf16.msra.mxu0 0
    %968 = vmatprep.subr.bf16.mxu0 0
    %969 = vmatpush2.bf16.msra.mxu0 0
    %970 = vmatprep.subr.bf16.mxu0 0
    %971 = vmatpush2.bf16.msra.mxu0 0
    %972 = vmatprep.subr.bf16.mxu0 0
    %973 = vmatpush2.bf16.msra.mxu0 0
    %974 = vmatprep.subr.bf16.mxu0 0
    %975 = vmatpush2.bf16.msra.mxu0 0
    %976 = vmatprep.subr.bf16.mxu0 0
    %977 = vmatpush2.bf16.msra.mxu0 0
    %978 = vmatprep.subr.bf16.mxu0 0
    %979 = vmatpush2.bf16.msra.mxu0 0
    %980 = vmatprep.subr.bf16.mxu0 0
    %981 = vmatpush2.bf16.msra.mxu0 0
    %982 = vmatprep.mubr.bf16.mxu0 0
    %983 = vmatmul.mubr.bf16.gmra.mxu0 %v948
    %v984 = vpop.f32.mrf.mxu0
    %v985 = vadd.f32 0.0, %v984
    %v986 = vpop.f32.mrf.mxu0
    %v987 = vpop.f32.mrf.mxu0
    %v988 = vpop.f32.mrf.mxu0
    %989 = vdwg.mxu0
    %v990 = vrcp.pop %v945
    %v991 = vmul.f32 %v985, %v990
    %v992 = vpack.c.bf16 %v991, %v991
    %994 = vrot.lane.b32.xlu0 %v992, 32
    %v995 = vpop.permute.xlu0 %994
    %v997 = vsel %vm72, %v892, %v995
    %v999 = vlaneseq
    %v1000 = vshrl.u32 %v999, 7
    %v1001 = vsub.s32 0, %v1000
    %v1002 = vrot.slane %v63, %v1001
    %v1012 = vunpack.c.l.b16 %v50
    %v1013 = vunpack.c.l.b16 %v51
    %v1014 = vunpack.c.l.b16 %v52
    %v1015 = vunpack.c.l.b16 %v53
    %v1016 = vunpack.c.l.b16 %v54
    %v1017 = vunpack.c.l.b16 %v55
    %v1018 = vunpack.c.l.b16 %v56
    %v1019 = vunpack.c.l.b16 %v57
    %v1020 = vpack.c.b16 %v1013, %v1012
    %v1021 = vpack.c.b16 %v1015, %v1014
    %v1022 = vpack.c.b16 %v1017, %v1016
    %v1023 = vpack.c.b16 %v1019, %v1018
    %v1028 = vsel %vm104, %v997, 0
    %1030 = vmatprep.subr.bf16.mxu0 0
    %1031 = vmatpush1.bf16.msra.mxu0 0
    %1032 = vmatprep.subr.bf16.mxu0 0
    %1033 = vmatpush1.bf16.msra.mxu0 0
    %1034 = vmatprep.subr.bf16.mxu0 0
    %1035 = vmatpush1.bf16.msra.mxu0 0
    %1036 = vmatprep.subr.bf16.mxu0 0
    %1037 = vmatpush1.bf16.msra.mxu0 0
    %1038 = vmatprep.subr.bf16.mxu0 0
    %1039 = vmatpush1.bf16.msra.mxu0 %v1023
    %1040 = vmatprep.subr.bf16.mxu0 0
    %1041 = vmatpush1.bf16.msra.mxu0 %v1022
    %1042 = vmatprep.subr.bf16.mxu0 0
    %1043 = vmatpush1.bf16.msra.mxu0 %v1021
    %1044 = vmatprep.subr.bf16.mxu0 0
    %1045 = vmatpush1.bf16.msra.mxu0 %v1020
    %1046 = vmatprep.subr.bf16.mxu0 0
    %1047 = vmatpush2.bf16.msra.mxu0 0
    %1048 = vmatprep.subr.bf16.mxu0 0
    %1049 = vmatpush2.bf16.msra.mxu0 0
    %1050 = vmatprep.subr.bf16.mxu0 0
    %1051 = vmatpush2.bf16.msra.mxu0 0
    %1052 = vmatprep.subr.bf16.mxu0 0
    %1053 = vmatpush2.bf16.msra.mxu0 0
    %1054 = vmatprep.subr.bf16.mxu0 0
    %1055 = vmatpush2.bf16.msra.mxu0 0
    %1056 = vmatprep.subr.bf16.mxu0 0
    %1057 = vmatpush2.bf16.msra.mxu0 0
    %1058 = vmatprep.subr.bf16.mxu0 0
    %1059 = vmatpush2.bf16.msra.mxu0 0
    %1060 = vmatprep.subr.bf16.mxu0 0
    %1061 = vmatpush2.bf16.msra.mxu0 0
    %1062 = vmatprep.mubr.bf16.mxu0 0
    %1063 = vmatmul.mubr.bf16.gmra.mxu0 %v1028
    %v1064 = vpop.f32.mrf.mxu0
    %v1065 = vadd.f32 %v1002, %v1064
    %v1066 = vpop.f32.mrf.mxu0
    %v1067 = vpop.f32.mrf.mxu0
    %v1068 = vpop.f32.mrf.mxu0
    %1069 = vdwg.mxu0
    %v1070 = vtanh.pop %v1065
    %v1071 = vpack.c.bf16 %v1070, %v1070
    %v1073 = vlaneseq
    %v1074 = vshrl.u32 %v1073, 7
    %v1075 = vsub.s32 0, %v1074
    %v1076 = vrot.slane %v64, %v1075
    %v1082 = vunpack.c.l.b16 %v58
    %v1083 = vunpack.c.l.b16 %v59
    %v1084 = vunpack.c.l.b16 %v60
    %v1085 = vunpack.c.l.b16 %v61
    %v1086 = vpack.c.b16 %v1083, %v1082
    %v1087 = vpack.c.b16 %v1085, %v1084
    %v1091 = vsel %vm72, %v1071, 0
    %1093 = vmatprep.subr.bf16.mxu0 0
    %1094 = vmatpush1.bf16.msra.mxu0 0
    %1095 = vmatprep.subr.bf16.mxu0 0
    %1096 = vmatpush1.bf16.msra.mxu0 0
    %1097 = vmatprep.subr.bf16.mxu0 0
    %1098 = vmatpush1.bf16.msra.mxu0 0
    %1099 = vmatprep.subr.bf16.mxu0 0
    %1100 = vmatpush1.bf16.msra.mxu0 0
    %1101 = vmatprep.subr.bf16.mxu0 0
    %1102 = vmatpush1.bf16.msra.mxu0 0
    %1103 = vmatprep.subr.bf16.mxu0 0
    %1104 = vmatpush1.bf16.msra.mxu0 0
    %1105 = vmatprep.subr.bf16.mxu0 0
    %1106 = vmatpush1.bf16.msra.mxu0 %v1087
    %1107 = vmatprep.subr.bf16.mxu0 0
    %1108 = vmatpush1.bf16.msra.mxu0 %v1086
    %1109 = vmatprep.subr.bf16.mxu0 0
    %1110 = vmatpush2.bf16.msra.mxu0 0
    %1111 = vmatprep.subr.bf16.mxu0 0
    %1112 = vmatpush2.bf16.msra.mxu0 0
    %1113 = vmatprep.subr.bf16.mxu0 0
    %1114 = vmatpush2.bf16.msra.mxu0 0
    %1115 = vmatprep.subr.bf16.mxu0 0
    %1116 = vmatpush2.bf16.msra.mxu0 0
    %1117 = vmatprep.subr.bf16.mxu0 0
    %1118 = vmatpush2.bf16.msra.mxu0 0
    %1119 = vmatprep.subr.bf16.mxu0 0
    %1120 = vmatpush2.bf16.msra.mxu0 0
    %1121 = vmatprep.subr.bf16.mxu0 0
    %1122 = vmatpush2.bf16.msra.mxu0 0
    %1123 = vmatprep.subr.bf16.mxu0 0
    %1124 = vmatpush2.bf16.msra.mxu0 0
    %1125 = vmatprep.mubr.bf16.mxu0 0
    %1126 = vmatmul.mubr.bf16.gmra.mxu0 %v1091
    %v1127 = vpop.f32.mrf.mxu0
    %v1128 = vadd.f32 %v1076, %v1127
    %v1129 = vpop.f32.mrf.mxu0
    %v1130 = vpop.f32.mrf.mxu0
    %v1131 = vpop.f32.mrf.mxu0
    %1132 = vdwg.mxu0
    %vm1133 = vcmask 74752
    %v1134 = vsel %vm1133, %v1128, -inf
    %1135 = vmax.xlane.f32.xlu0 %v1134
    %v1136 = vpop.xlane.xlu0 %1135
    %v1137 = vsub.f32 %v1128, %v1136
    %v1138 = vmul.f32 %v1137, 1.442695
    %v1139 = vpow.pop %v1138
    %v1140 = vsel %vm1133, %v1139, 0.0
    %1141 = vadd.xlane.f32.xlu0 %v1140
    %v1142 = vpop.xlane.xlu0 %1141
    %v1143 = vrcp.pop %v1142
    %v1144 = vmul.f32 %v1139, %v1143
    %1145 = vst.msk [vmem:[#allocation5] sm:$0x3] %vm1133, %v1144
    // Predicated region
    $region26: #{tpu_custom_call.1} parent=1 // pred_check
      _
    $region27: #{tpu_custom_call.1} parent=1 // pred_check_branch
      %1147 = sbr.rel (0) target = $region29
    $region28: #{tpu_custom_call.1} parent=1 // pred_region
      %s1149 = ssub.s32 32, 32
      %1150 = vsyncadd [#allocation4], %s1149
      %s1152 = sshll.u32 [#allocation5], 4
      %s1153 = int_to_ptr.vmem [resolvable:$true] %s1152
      %1155 = dma.vmem_to_hbm [thread:$0]  %s1153, 32, %s5, [#allocation4]
    $region29: #{tpu_custom_call.1} parent=1 // pred_fallthru
      _
    // Predicated region
    $region30: #{tpu_custom_call.1} parent=1 // pred_check
      _
    $region31: #{tpu_custom_call.1} parent=1 // pred_check_branch
      %1157 = sbr.rel (0) target = $region33
    $region32: #{tpu_custom_call.1} parent=1 // pred_region
      %1158 = dma.done [#allocation4], 32
    $region33: #{tpu_custom_call.1} parent=1 // pred_fallthru
      _
    %1159 = vsyncpa [#allocation3], 1
    %1160 = vsyncpa [#allocation4], 1

</llo_original>
